<compile_context>
chip_gen: v7x
topology: tpu7x:2x2x1
jax: 0.10.0
libtpu: 0.0.40
codegen_flags: <defaults>
</compile_context>

<pallas_src>
import jax
import jax.numpy as jnp
from jax.experimental import pallas as pl
from jax.experimental.pallas import tpu as pltpu


def _vmem_limit_bytes():
    """Generation-aware scoped-VMEM budget."""
    try:
        cap = int(pltpu.get_tpu_info().vmem_capacity_bytes)
        if cap >= 96 * 1024 * 1024:
            return 96 * 1024 * 1024          # v5e / v6e (128 MiB physical)
    except Exception:
        pass
    return 32 * 1024 * 1024                  # v7x (64 MiB physical) / unknown


def _pick_th(OH, OW):
    """Row-tile: TH*OW >= 512 for the MXU, multiple of 8, capped by OH and VMEM."""
    th = -(-512 // OW)
    th = max(8, ((th + 7) // 8) * 8)
    row_cap = max(8, (2048 // max(OW, 1)) // 8 * 8)   # ~1 MiB f32 acc per tile
    th = min(th, row_cap)
    oh_cap = ((OH + 7) // 8) * 8
    return max(8, min(th, oh_cap))


def _make_conv_stats_kernel(OH, OW, TH, KH, KW, Cin, K, K_pad, stride):
    """Conv-as-matmul for one (batch, row-tile) + fused per-tile BN partial sums."""
    band_rows = (TH - 1) * stride + KH  # padded-input rows feeding TH output rows

    def kernel(x_ref, w_ref, out_ref, stats_ref, patch_ref):
        i = pl.program_id(1)
        r0 = pl.multiple_of(i * (TH * stride), TH * stride)
        # bf16 input row band; the (TH*OW, K_pad) im2col tile is assembled in VMEM
        # directly in bf16 (no HBM blow-up, no f32 cast passes).
        band = x_ref[0, pl.ds(r0, band_rows), :, :]

        if K_pad > K:
            # Keep the K padding columns zero so uninitialized scratch never
            # reaches the MXU (NaN * 0 = NaN otherwise).
            patch_ref[:, K:] = jnp.zeros((TH * OW, K_pad - K), jnp.bfloat16)
        for kh in range(KH):
            for kw in range(KW):
                if stride == 1:
                    sub = band[kh:kh + TH, kw:kw + OW, :]
                else:
                    # TODO(synk): in-kernel strided slice for stride>1 is a
                    # lowering/perf risk; pre-decimate in the wrapper for real use.
                    sub = jax.lax.slice(
                        band, (kh, kw, 0),
                        (kh + (TH - 1) * stride + 1, kw + (OW - 1) * stride + 1, Cin),
                        (stride, stride, 1))
                col = (kh * KW + kw) * Cin
                patch_ref[:, col:col + Cin] = sub.reshape(TH * OW, Cin)

        acc = jnp.dot(patch_ref[...], w_ref[...],
                      preferred_element_type=jnp.float32)   # (TH*OW, Cout_pad) f32

        if OH % TH != 0:
            # Zero OH tail-padding rows so BN partial sums stay exact.
            row = jax.lax.broadcasted_iota(jnp.int32, (TH * OW, 1), 0)
            valid = (i * TH + row // OW) < OH
            acc = jnp.where(valid, acc, 0.0)

        # bf16 intermediate at the HBM boundary; stats from the exact f32 acc.
        out_ref[0] = acc.astype(jnp.bfloat16)
        stats_ref[0, 0, 0:1, :] = jnp.sum(acc, axis=0, keepdims=True)
        stats_ref[0, 0, 1:2, :] = jnp.sum(acc * acc, axis=0, keepdims=True)

    return kernel


def _make_bn_relu_nchw_kernel(Cout, TH, OW):
    """Normalize + ReLU one row tile and write it directly in NCHW layout."""
    def kernel(x_ref, scale_ref, shift_ref, o_ref):
        x = x_ref[0].astype(jnp.float32)                         # (TH*OW, Cout_pad)
        y = jnp.maximum(x * scale_ref[...] + shift_ref[...], 0.0)
        yt = jnp.transpose(y)                                    # (Cout_pad, TH*OW)
        for th in range(TH):                                     # static, unrolled
            o_ref[0, :, th, :] = yt[:Cout, th * OW:(th + 1) * OW]
    return kernel


def conv_block_forward(x_nchw, w, gamma, beta, *, stride=1, padding=0, eps=1e-5):
    """convBlock forward: Conv2d(bias=False) -> BatchNorm2d (training stats) -> ReLU."""
    N, Cin, H, W = x_nchw.shape
    Cout, _, KH, KW = w.shape
    OH = (H + 2 * padding - KH) // stride + 1
    OW = (W + 2 * padding - KW) // stride + 1
    Cout_pad = -(-Cout // 128) * 128
    K = KH * KW * Cin
    K_pad = -(-K // 128) * 128

    TH = _pick_th(OH, OW)
    n_row_tiles = -(-OH // TH)
    OH_pad = n_row_tiles * TH

    # --- wrapper glue: NCHW -> NHWC (bf16), zero-pad for conv window + row tail --
    x = jnp.transpose(x_nchw, (0, 2, 3, 1)).astype(jnp.bfloat16)
    Wp = W + 2 * padding
    rows_needed = (OH_pad - 1) * stride + KH
    pad_bottom = max(padding, rows_needed - (H + padding))
    xp = jnp.pad(x, ((0, 0), (padding, pad_bottom), (padding, padding), (0, 0)))
    Hp = H + padding + pad_bottom

    # (Cout, Cin, KH, KW) -> (KH, KW, Cin, Cout) -> (K_pad, Cout_pad) bf16, padded.
    w_mat = jnp.transpose(w, (2, 3, 1, 0)).reshape(K, Cout).astype(jnp.bfloat16)
    w_mat = jnp.pad(w_mat, ((0, K_pad - K), (0, Cout_pad - Cout)))

    vmem_limit = _vmem_limit_bytes()

    # --- kernel 1: conv matmul (bf16 intermediate) + per-tile BN partial sums ----
    conv_kernel = _make_conv_stats_kernel(OH, OW, TH, KH, KW, Cin, K, K_pad, stride)
    conv_out, part_stats = pl.pallas_call(
        conv_kernel,
        out_shape=(jax.ShapeDtypeStruct((N, OH_pad * OW, Cout_pad), jnp.bfloat16),
                   jax.ShapeDtypeStruct((N, n_row_tiles, 2, Cout_pad), jnp.float32)),
        grid_spec=pltpu.PrefetchScalarGridSpec(
            num_scalar_prefetch=0,
            grid=(N, n_row_tiles),
            in_specs=[
                # TODO(synk): for very large H*W*Cin switch this to memory_space=pl.ANY
                # with manual row-band double-buffer DMA (v7x 64 MiB VMEM budget).
                pl.BlockSpec((1, Hp, Wp, Cin), lambda n, i: (n, 0, 0, 0)),
                pl.BlockSpec((K_pad, Cout_pad), lambda n, i: (0, 0)),
            ],
            out_specs=[
                pl.BlockSpec((1, TH * OW, Cout_pad), lambda n, i: (n, i, 0)),
                pl.BlockSpec((1, 1, 2, Cout_pad), lambda n, i: (n, i, 0, 0)),
            ],
            scratch_shapes=[pltpu.VMEM((TH * OW, K_pad), jnp.bfloat16)],
        ),
        compiler_params=pltpu.CompilerParams(
            dimension_semantics=("parallel", "parallel"),
            vmem_limit_bytes=vmem_limit),
    )(xp, w_mat)

    # --- tiny reduction over tiles -> per-channel scale/shift (training-mode BN) -
    m_true = N * OH * OW
    s = jnp.sum(part_stats, axis=(0, 1))                  # (2, Cout_pad) f32
    mean = s[0] / m_true
    # TODO(synk): E[x^2]-E[x]^2 can cancel for large-mean activations; switch to
    # Chan's centered partial sums if this path is used for real training.
    var = jnp.maximum(s[1] / m_true - mean * mean, 0.0)   # biased batch variance
    gamma_p = jnp.pad(gamma.astype(jnp.float32), (0, Cout_pad - Cout))
    beta_p = jnp.pad(beta.astype(jnp.float32), (0, Cout_pad - Cout))
    inv = jax.lax.rsqrt(var + eps)
    scale = (gamma_p * inv).reshape(1, Cout_pad)
    shift = (beta_p - mean * gamma_p * inv).reshape(1, Cout_pad)

    # --- kernel 2: normalize + ReLU, fused crop + NHWC->NCHW write ---------------
    bn_kernel = _make_bn_relu_nchw_kernel(Cout, TH, OW)
    y = pl.pallas_call(
        bn_kernel,
        out_shape=jax.ShapeDtypeStruct((N, Cout, OH, OW), jnp.float32),
        grid_spec=pltpu.PrefetchScalarGridSpec(
            num_scalar_prefetch=0,
            grid=(N, n_row_tiles),
            in_specs=[
                pl.BlockSpec((1, TH * OW, Cout_pad), lambda n, i: (n, i, 0)),
                pl.BlockSpec((1, Cout_pad), lambda n, i: (0, 0)),
                pl.BlockSpec((1, Cout_pad), lambda n, i: (0, 0)),
            ],
            out_specs=pl.BlockSpec((1, Cout, TH, OW), lambda n, i: (n, 0, i, 0)),
        ),
        compiler_params=pltpu.CompilerParams(
            dimension_semantics=("parallel", "parallel"),
            vmem_limit_bytes=vmem_limit),
    )(conv_out, scale, shift)

    # TODO(synk): BatchNorm2d running_mean/running_var buffer updates (a training
    # side effect) are not part of the returned forward value and are omitted.
    return y


if __name__ == "__main__":
    # convBlock(in_channels=4, out_channels=8, kernel_size=3, padding=1, stride=1)
    N, Cin, H, W = 2, 4, 16, 16
    Cout, Ksz, pad, stride = 8, 3, 1, 1

    key = jax.random.PRNGKey(0)
    kx, kw = jax.random.split(key)
    x = jax.random.normal(kx, (N, Cin, H, W), dtype=jnp.float32)
    w = jax.random.normal(kw, (Cout, Cin, Ksz, Ksz), dtype=jnp.float32) * 0.1
    gamma = jnp.ones((Cout,), dtype=jnp.float32)   # BatchNorm2d default affine init
    beta = jnp.zeros((Cout,), dtype=jnp.float32)

    out = conv_block_forward(x, w, gamma, beta, stride=stride, padding=pad)
    jax.block_until_ready(out)
    assert out.shape == (N, Cout, H, W), out.shape

    # Reference mirroring the kernel's rounding points: bf16 inputs/weights, f32 conv
    # accumulation, f32 batch stats, bf16 conv intermediate, f32 normalize + ReLU.
    x_bf = x.astype(jnp.bfloat16).astype(jnp.float32)
    w_bf = w.astype(jnp.bfloat16).astype(jnp.float32)
    conv_ref = jax.lax.conv_general_dilated(
        x_bf, w_bf, (stride, stride), [(pad, pad), (pad, pad)],
        dimension_numbers=("NCHW", "OIHW", "NCHW"))
    mu = conv_ref.mean(axis=(0, 2, 3), keepdims=True)
    va = conv_ref.var(axis=(0, 2, 3), keepdims=True)     # biased, like PyTorch BN fwd
    conv_q = conv_ref.astype(jnp.bfloat16).astype(jnp.float32)
    ref = jnp.maximum((conv_q - mu) * jax.lax.rsqrt(va + 1e-5)
                      * gamma[None, :, None, None] + beta[None, :, None, None], 0.0)
    err = float(jnp.max(jnp.abs(out - ref)))
    assert err < 2e-2, f"max abs err {err}"
    print("KERNEL_OK")
</pallas_src>

<mosaic_0001>
module attributes {stable_mosaic.version = 11 : i64} {
  func.func @kernel(%arg0: i32, %arg1: i32, %arg2: memref<1x18x18x4xbf16, #tpu.memory_space<vmem>>, %arg3: memref<128x128xbf16, #tpu.memory_space<vmem>>, %arg4: memref<1x256x128xbf16, #tpu.memory_space<vmem>>, %arg5: memref<1x1x2x128xf32, #tpu.memory_space<vmem>>, %arg6: memref<256x128xbf16, #tpu.memory_space<vmem>>) attributes {dimension_semantics = [#tpu.dimension_semantics<parallel>, #tpu.dimension_semantics<parallel>], iteration_bounds = array<i64: 2, 1>, scalar_prefetch = 0 : i64, scratch_operands = 1 : i64, tpu.core_type = #tpu.core_type<tc>, window_params = [{transform_indices = @transform_0, window_bounds = array<i64: 1, 18, 18, 4>}, {pipeline_mode = #tpu.pipeline_mode<synchronous>, transform_indices = @transform_1, window_bounds = array<i64: 128, 128>}, {transform_indices = @transform_2, window_bounds = array<i64: 1, 256, 128>}, {transform_indices = @transform_3, window_bounds = array<i64: 1, 1, 2, 128>}]} {
    %c16_i32 = arith.constant 16 : i32
    %0 = arith.muli %arg1, %c16_i32 : i32
    %1 = tpu.assume_multiple %0, 16 : i32
    %c0 = arith.constant 0 : index
    %2 = arith.index_cast %1 : i32 to index
    %c0_0 = arith.constant 0 : index
    %c0_1 = arith.constant 0 : index
    %3 = vector.load %arg2[%c0, %2, %c0_0, %c0_1] : memref<1x18x18x4xbf16, #tpu.memory_space<vmem>>, vector<1x18x18x4xbf16>
    %4 = vector.shape_cast %3 : vector<1x18x18x4xbf16> to vector<18x18x4xbf16>
    %cst = arith.constant 0.000000e+00 : bf16
    %5 = vector.broadcast %cst : bf16 to vector<256x92xbf16>
    %c0_2 = arith.constant 0 : index
    %c36 = arith.constant 36 : index
    %6 = vector.load %arg6[%c0_2, %c36] : memref<256x128xbf16, #tpu.memory_space<vmem>>, vector<256x92xbf16>
    tpu.vector_store %arg6[%c0_2, %c36], %5 {strides = array<i32>} : memref<256x128xbf16, #tpu.memory_space<vmem>>, vector<256x92xbf16>,
    %7 = vector.extract_strided_slice %4 {offsets = [0, 0, 0], sizes = [16, 16, 4], strides = [1, 1, 1]} : vector<18x18x4xbf16> to vector<16x16x4xbf16>
    %8 = vector.shape_cast %7 : vector<16x16x4xbf16> to vector<256x4xbf16>
    %c0_3 = arith.constant 0 : index
    %c0_4 = arith.constant 0 : index
    %9 = vector.load %arg6[%c0_3, %c0_4] : memref<256x128xbf16, #tpu.memory_space<vmem>>, vector<256x4xbf16>
    tpu.vector_store %arg6[%c0_3, %c0_4], %8 {strides = array<i32>} : memref<256x128xbf16, #tpu.memory_space<vmem>>, vector<256x4xbf16>,
    %10 = vector.extract_strided_slice %4 {offsets = [0, 1, 0], sizes = [16, 16, 4], strides = [1, 1, 1]} : vector<18x18x4xbf16> to vector<16x16x4xbf16>
    %11 = vector.shape_cast %10 : vector<16x16x4xbf16> to vector<256x4xbf16>
    %c0_5 = arith.constant 0 : index
    %c4 = arith.constant 4 : index
    %12 = vector.load %arg6[%c0_5, %c4] : memref<256x128xbf16, #tpu.memory_space<vmem>>, vector<256x4xbf16>
    tpu.vector_store %arg6[%c0_5, %c4], %11 {strides = array<i32>} : memref<256x128xbf16, #tpu.memory_space<vmem>>, vector<256x4xbf16>,
    %13 = vector.extract_strided_slice %4 {offsets = [0, 2, 0], sizes = [16, 16, 4], strides = [1, 1, 1]} : vector<18x18x4xbf16> to vector<16x16x4xbf16>
    %14 = vector.shape_cast %13 : vector<16x16x4xbf16> to vector<256x4xbf16>
    %c0_6 = arith.constant 0 : index
    %c8 = arith.constant 8 : index
    %15 = vector.load %arg6[%c0_6, %c8] : memref<256x128xbf16, #tpu.memory_space<vmem>>, vector<256x4xbf16>
    tpu.vector_store %arg6[%c0_6, %c8], %14 {strides = array<i32>} : memref<256x128xbf16, #tpu.memory_space<vmem>>, vector<256x4xbf16>,
    %16 = vector.extract_strided_slice %4 {offsets = [1, 0, 0], sizes = [16, 16, 4], strides = [1, 1, 1]} : vector<18x18x4xbf16> to vector<16x16x4xbf16>
    %17 = vector.shape_cast %16 : vector<16x16x4xbf16> to vector<256x4xbf16>
    %c0_7 = arith.constant 0 : index
    %c12 = arith.constant 12 : index
    %18 = vector.load %arg6[%c0_7, %c12] : memref<256x128xbf16, #tpu.memory_space<vmem>>, vector<256x4xbf16>
    tpu.vector_store %arg6[%c0_7, %c12], %17 {strides = array<i32>} : memref<256x128xbf16, #tpu.memory_space<vmem>>, vector<256x4xbf16>,
    %19 = vector.extract_strided_slice %4 {offsets = [1, 1, 0], sizes = [16, 16, 4], strides = [1, 1, 1]} : vector<18x18x4xbf16> to vector<16x16x4xbf16>
    %20 = vector.shape_cast %19 : vector<16x16x4xbf16> to vector<256x4xbf16>
    %c0_8 = arith.constant 0 : index
    %c16 = arith.constant 16 : index
    %21 = vector.load %arg6[%c0_8, %c16] : memref<256x128xbf16, #tpu.memory_space<vmem>>, vector<256x4xbf16>
    tpu.vector_store %arg6[%c0_8, %c16], %20 {strides = array<i32>} : memref<256x128xbf16, #tpu.memory_space<vmem>>, vector<256x4xbf16>,
    %22 = vector.extract_strided_slice %4 {offsets = [1, 2, 0], sizes = [16, 16, 4], strides = [1, 1, 1]} : vector<18x18x4xbf16> to vector<16x16x4xbf16>
    %23 = vector.shape_cast %22 : vector<16x16x4xbf16> to vector<256x4xbf16>
    %c0_9 = arith.constant 0 : index
    %c20 = arith.constant 20 : index
    %24 = vector.load %arg6[%c0_9, %c20] : memref<256x128xbf16, #tpu.memory_space<vmem>>, vector<256x4xbf16>
    tpu.vector_store %arg6[%c0_9, %c20], %23 {strides = array<i32>} : memref<256x128xbf16, #tpu.memory_space<vmem>>, vector<256x4xbf16>,
    %25 = vector.extract_strided_slice %4 {offsets = [2, 0, 0], sizes = [16, 16, 4], strides = [1, 1, 1]} : vector<18x18x4xbf16> to vector<16x16x4xbf16>
    %26 = vector.shape_cast %25 : vector<16x16x4xbf16> to vector<256x4xbf16>
    %c0_10 = arith.constant 0 : index
    %c24 = arith.constant 24 : index
    %27 = vector.load %arg6[%c0_10, %c24] : memref<256x128xbf16, #tpu.memory_space<vmem>>, vector<256x4xbf16>
    tpu.vector_store %arg6[%c0_10, %c24], %26 {strides = array<i32>} : memref<256x128xbf16, #tpu.memory_space<vmem>>, vector<256x4xbf16>,
    %28 = vector.extract_strided_slice %4 {offsets = [2, 1, 0], sizes = [16, 16, 4], strides = [1, 1, 1]} : vector<18x18x4xbf16> to vector<16x16x4xbf16>
    %29 = vector.shape_cast %28 : vector<16x16x4xbf16> to vector<256x4xbf16>
    %c0_11 = arith.constant 0 : index
    %c28 = arith.constant 28 : index
    %30 = vector.load %arg6[%c0_11, %c28] : memref<256x128xbf16, #tpu.memory_space<vmem>>, vector<256x4xbf16>
    tpu.vector_store %arg6[%c0_11, %c28], %29 {strides = array<i32>} : memref<256x128xbf16, #tpu.memory_space<vmem>>, vector<256x4xbf16>,
    %31 = vector.extract_strided_slice %4 {offsets = [2, 2, 0], sizes = [16, 16, 4], strides = [1, 1, 1]} : vector<18x18x4xbf16> to vector<16x16x4xbf16>
    %32 = vector.shape_cast %31 : vector<16x16x4xbf16> to vector<256x4xbf16>
    %c0_12 = arith.constant 0 : index
    %c32 = arith.constant 32 : index
    %33 = vector.load %arg6[%c0_12, %c32] : memref<256x128xbf16, #tpu.memory_space<vmem>>, vector<256x4xbf16>
    tpu.vector_store %arg6[%c0_12, %c32], %32 {strides = array<i32>} : memref<256x128xbf16, #tpu.memory_space<vmem>>, vector<256x4xbf16>,
    %c0_13 = arith.constant 0 : index
    %c0_14 = arith.constant 0 : index
    %34 = vector.load %arg6[%c0_13, %c0_14] : memref<256x128xbf16, #tpu.memory_space<vmem>>, vector<256x128xbf16>
    %c0_15 = arith.constant 0 : index
    %c0_16 = arith.constant 0 : index
    %35 = vector.load %arg3[%c0_15, %c0_16] : memref<128x128xbf16, #tpu.memory_space<vmem>>, vector<128x128xbf16>
    %cst_17 = arith.constant dense<0.000000e+00> : vector<256x128xf32>
    %36 = tpu.matmul %34, %35, %cst_17 {dimension_numbers = #tpu.dot_dimension_numbers<[1], [0], [0], [1], [0, 0, 1, 1], [], []>} : vector<256x128xbf16>, vector<128x128xbf16>, vector<256x128xf32> -> vector<256x128xf32>
    %37 = arith.truncf %36 : vector<256x128xf32> to vector<256x128xbf16>
    %c0_18 = arith.constant 0 : index
    %c0_19 = arith.constant 0 : index
    %c0_20 = arith.constant 0 : index
    %38 = vector.load %arg4[%c0_18, %c0_19, %c0_20] : memref<1x256x128xbf16, #tpu.memory_space<vmem>>, vector<1x256x128xbf16>
    %39 = vector.shape_cast %38 : vector<1x256x128xbf16> to vector<256x128xbf16>
    %40 = vector.shape_cast %37 : vector<256x128xbf16> to vector<1x256x128xbf16>
    tpu.vector_store %arg4[%c0_18, %c0_19, %c0_20], %40 {strides = array<i32>} : memref<1x256x128xbf16, #tpu.memory_space<vmem>>, vector<1x256x128xbf16>,
    %cst_21 = arith.constant dense<0.000000e+00> : vector<128xf32>
    %41 = vector.multi_reduction <add>, %36, %cst_21 [0] : vector<256x128xf32> to vector<128xf32>
    %42 = vector.shape_cast %41 : vector<128xf32> to vector<1x128xf32>
    %c0_22 = arith.constant 0 : index
    %c0_23 = arith.constant 0 : index
    %c0_24 = arith.constant 0 : index
    %c0_25 = arith.constant 0 : index
    %43 = vector.load %arg5[%c0_22, %c0_23, %c0_24, %c0_25] : memref<1x1x2x128xf32, #tpu.memory_space<vmem>>, vector<1x1x1x128xf32>
    %44 = vector.shape_cast %43 : vector<1x1x1x128xf32> to vector<1x128xf32>
    %45 = vector.shape_cast %42 : vector<1x128xf32> to vector<1x1x1x128xf32>
    tpu.vector_store %arg5[%c0_22, %c0_23, %c0_24, %c0_25], %45 {strides = array<i32>} : memref<1x1x2x128xf32, #tpu.memory_space<vmem>>, vector<1x1x1x128xf32>,
    %46 = arith.mulf %36, %36 : vector<256x128xf32>
    %cst_26 = arith.constant dense<0.000000e+00> : vector<128xf32>
    %47 = vector.multi_reduction <add>, %46, %cst_26 [0] : vector<256x128xf32> to vector<128xf32>
    %48 = vector.shape_cast %47 : vector<128xf32> to vector<1x128xf32>
    %c0_27 = arith.constant 0 : index
    %c0_28 = arith.constant 0 : index
    %c1 = arith.constant 1 : index
    %c0_29 = arith.constant 0 : index
    %49 = vector.load %arg5[%c0_27, %c0_28, %c1, %c0_29] : memref<1x1x2x128xf32, #tpu.memory_space<vmem>>, vector<1x1x1x128xf32>
    %50 = vector.shape_cast %49 : vector<1x1x1x128xf32> to vector<1x128xf32>
    %51 = vector.shape_cast %48 : vector<1x128xf32> to vector<1x1x1x128xf32>
    tpu.vector_store %arg5[%c0_27, %c0_28, %c1, %c0_29], %51 {strides = array<i32>} : memref<1x1x2x128xf32, #tpu.memory_space<vmem>>, vector<1x1x1x128xf32>,
    return
  }
  func.func @transform_0(%arg0: i32, %arg1: i32) -> (i32, i32, i32, i32) {
    %c0_i32 = arith.constant 0 : i32
    %c0_i32_0 = arith.constant 0 : i32
    %c0_i32_1 = arith.constant 0 : i32
    %c0_i32_2 = arith.constant 0 : i32
    return %arg0, %c0_i32, %c0_i32_0, %c0_i32_1 : i32, i32, i32, i32
  }
  func.func @transform_1(%arg0: i32, %arg1: i32) -> (i32, i32) {
    %c0_i32 = arith.constant 0 : i32
    %c0_i32_0 = arith.constant 0 : i32
    %c0_i32_1 = arith.constant 0 : i32
    return %c0_i32, %c0_i32_0 : i32, i32
  }
  func.func @transform_2(%arg0: i32, %arg1: i32) -> (i32, i32, i32) {
    %c0_i32 = arith.constant 0 : i32
    %c0_i32_0 = arith.constant 0 : i32
    return %arg0, %arg1, %c0_i32 : i32, i32, i32
  }
  func.func @transform_3(%arg0: i32, %arg1: i32) -> (i32, i32, i32, i32) {
    %c0_i32 = arith.constant 0 : i32
    %c0_i32_0 = arith.constant 0 : i32
    %c0_i32_1 = arith.constant 0 : i32
    return %arg0, %arg1, %c0_i32, %c0_i32_0 : i32, i32, i32, i32
  }
}

</mosaic_0001>

<llo_original>
// kernel: tpu_custom_call.1
$region0: #{tpu_custom_call.1}
  #allocation0 [shape = 'u32[]', space=smem, size = 0x4, offset = 0x4, fixed_abs, tag = 'smem constant byte address 0x4 - core index']
  #allocation1 [shape = 'u32[144,128]{1,0:T(1,128)}', space=vmem, size = 0x12000, scoped, tag = 'internal scratch']
  #allocation2 [shape = 'bf16[256,128]{1,0:T(16,128)(2,1)}', space=vmem, size = 0x10000, scoped, tag = 'scratch operand']
  %s0 = inlined_call_operand.vmem [shape: bf16[2,18,18,4], index: 0, kind: input, shape index: {}]
  %s1 = inlined_call_operand.vmem [shape: bf16[128,128], index: 1, kind: input, shape index: {}]
  %s2 = inlined_call_operand.hbm [shape: bf16[2,256,128], index: 2, kind: output, shape index: {0}]
  %s3 = inlined_call_operand.hbm [shape: f32[2,1,2,128], index: 3, kind: output, shape index: {1}]
  %4 = xla_tuple %s2, %s3
  %s5 = sld [smem:[#allocation0]]
  $region49: #{tpu_custom_call.1} parent=0
    _
  %s7 = ssub.s32 1, %s5
  %s8 = scalar_select 0, %s7, %s5
  $region1: #{tpu_custom_call.1} parent=0
    #allocation3 [shape = 'u8[131072]{0}', space=vmem, size = 0x20000, scoped, tag = 'output window, operand 0']
    #allocation4 [shape = 's32[2]{0}', space=sflag, size = 0x8, scoped, tag = 'scoped memory for tpu_custom_call.1']
    #allocation5 [shape = 'u8[2048]{0}', space=vmem, size = 0x800, scoped, tag = 'output window, operand 1']
    #allocation6 [shape = 's32[2]{0}', space=sflag, size = 0x8, scoped, tag = 'scoped memory for tpu_custom_call.1']
    %9 = vsyncpa [#allocation4], 0
    %s10 = scalar_lea.sflag [#allocation4], 1
    %11 = vsyncpa %s10, 0
    %12 = vsyncpa [#allocation6], 0
    %s13 = scalar_lea.sflag [#allocation6], 1
    %14 = vsyncpa %s13, 0
    loop: start=0, step=1, limit=4
    $region2: #{tpu_custom_call.1} parent=1 // loop_pre_header
      _
    $region3: #{tpu_custom_call.1} parent=1 // loop_header
      %s16 = sphi 0, %s20
      %p17 = scmp.ge.s32.totalorder %s16, 4
      %s23 = sphi 0, %s35
      %s24 = sphi 0, %s31
      %s25 = sphi 0, %s23
      %s26 = sphi 0, %s24
      %s27 = sphi 0, %s25
      %s28 = sphi 0, %s26
      %s38 = sphi 0, %s40
      %s41 = sphi 0, %s38
      %s42 = sphi 0, %s41
      %s58 = sphi 0, %s42
      %s62 = sphi 0, %s62
      %s64 = sphi 0, %s62
      %s65 = sphi 0, %s64
      %s79 = sphi 0, %s65
      %s87 = sphi 0, %s89
      %s90 = sphi 0, %s87
      %s91 = sphi 0, %s90
      %s107 = sphi 0, %s91
      %s115 = sphi 0, %s117
      %s118 = sphi 0, %s115
      %s119 = sphi 0, %s118
      %s135 = sphi 0, %s119
    $region4: #{tpu_custom_call.1} parent=1 // loop_header_branch
      %19 = sbr.rel (%p17) target = $region8
    $region5: #{tpu_custom_call.1} parent=1 // loop_body
      %s21 = ssub.s32 %s16, 1
      %s22 = ssub.s32 %s16, 2
      %s29 = sadd.s32 1, %s24
      %p30 = scmp.ge.s32.totalorder %s29, 1
      %s31 = scalar_select %p30, 0, %s29
      %s32 = sadd.s32 1, %s23
      %s33 = scalar_select %p30, %s32, %s23
      %p34 = scmp.ge.s32.totalorder %s33, 2
      %s35 = scalar_select %p34, 0, %s33
      %s36 = ssub.s32 %s23, %s35
      %p37 = scmp.eq.s32.totalorder %s36, 0
      %s39 = sadd.s32 %s38, 1
      %s40 = scalar_select %p37, %s38, %s39
      %p43 = pneg %p37
      %p44 = scmp.eq.s32.totalorder %s16, 1
      %p45 = por %p43, %p44
      %p46 = scmp.ne.s32.totalorder %s38, %s41
      %p47 = scmp.eq.s32.totalorder %s16, 0
      %p48 = por %p46, %p47
      %p49 = scmp.ne.s32.totalorder %s38, %s41
      %p50 = scmp.eq.s32.totalorder %s21, 1
      %p51 = por %p49, %p50
      %p52 = scmp.ne.s32.totalorder %s41, %s42
      %p53 = scmp.eq.s32.totalorder %s21, 0
      %p54 = por %p52, %p53
      %p55 = scmp.ne.s32.totalorder %s41, %s42
      %p56 = scmp.eq.s32.totalorder %s22, 1
      %p57 = por %p55, %p56
      %p59 = scmp.ne.s32.totalorder %s42, %s58
      %p60 = scmp.eq.s32.totalorder %s22, 0
      %p61 = por %p59, %p60
      %s63 = sadd.s32 %s62, 1
      %p66 = scmp.eq.s32.totalorder %s16, 1
      %p67 = scmp.ne.s32.totalorder %s62, %s64
      %p68 = scmp.eq.s32.totalorder %s16, 0
      %p69 = por %p67, %p68
      %p70 = scmp.ne.s32.totalorder %s62, %s64
      %p71 = scmp.eq.s32.totalorder %s21, 1
      %p72 = por %p70, %p71
      %p73 = scmp.ne.s32.totalorder %s64, %s65
      %p74 = scmp.eq.s32.totalorder %s21, 0
      %p75 = por %p73, %p74
      %p76 = scmp.ne.s32.totalorder %s64, %s65
      %p77 = scmp.eq.s32.totalorder %s22, 1
      %p78 = por %p76, %p77
      %p80 = scmp.ne.s32.totalorder %s65, %s79
      %p81 = scmp.eq.s32.totalorder %s22, 0
      %p82 = por %p80, %p81
      %s83 = ssub.s32 %s23, %s35
      %s84 = ssub.s32 %s24, %s31
      %s85 = sor.u32 %s83, %s84
      %p86 = scmp.eq.s32.totalorder %s85, 0
      %s88 = sadd.s32 %s87, 1
      %s89 = scalar_select %p86, %s87, %s88
      %p92 = pneg %p86
      %p93 = scmp.eq.s32.totalorder %s16, 1
      %p94 = por %p92, %p93
      %p95 = scmp.ne.s32.totalorder %s87, %s90
      %p96 = scmp.eq.s32.totalorder %s16, 0
      %p97 = por %p95, %p96
      %p98 = scmp.ne.s32.totalorder %s87, %s90
      %p99 = scmp.eq.s32.totalorder %s21, 1
      %p100 = por %p98, %p99
      %p101 = scmp.ne.s32.totalorder %s90, %s91
      %p102 = scmp.eq.s32.totalorder %s21, 0
      %p103 = por %p101, %p102
      %p104 = scmp.ne.s32.totalorder %s90, %s91
      %p105 = scmp.eq.s32.totalorder %s22, 1
      %p106 = por %p104, %p105
      %p108 = scmp.ne.s32.totalorder %s91, %s107
      %p109 = scmp.eq.s32.totalorder %s22, 0
      %p110 = por %p108, %p109
      %s111 = ssub.s32 %s23, %s35
      %s112 = ssub.s32 %s24, %s31
      %s113 = sor.u32 %s111, %s112
      %p114 = scmp.eq.s32.totalorder %s113, 0
      %s116 = sadd.s32 %s115, 1
      %s117 = scalar_select %p114, %s115, %s116
      %p120 = pneg %p114
      %p121 = scmp.eq.s32.totalorder %s16, 1
      %p122 = por %p120, %p121
      %p123 = scmp.ne.s32.totalorder %s115, %s118
      %p124 = scmp.eq.s32.totalorder %s16, 0
      %p125 = por %p123, %p124
      %p126 = scmp.ne.s32.totalorder %s115, %s118
      %p127 = scmp.eq.s32.totalorder %s21, 1
      %p128 = por %p126, %p127
      %p129 = scmp.ne.s32.totalorder %s118, %s119
      %p130 = scmp.eq.s32.totalorder %s21, 0
      %p131 = por %p129, %p130
      %p132 = scmp.ne.s32.totalorder %s118, %s119
      %p133 = scmp.eq.s32.totalorder %s22, 1
      %p134 = por %p132, %p133
      %p136 = scmp.ne.s32.totalorder %s119, %s135
      %p137 = scmp.eq.s32.totalorder %s22, 0
      %p138 = por %p136, %p137
      %p139 = scmp.le.s32.totalorder 1, %s16
      %p140 = scmp.lt.s32.totalorder %s16, 3
      %p141 = pnand %p139, %p140
      %p142 = pneg %p141
      // Predicated region
      $region9: #{tpu_custom_call.1} parent=5 // pred_check
        _
      $region10: #{tpu_custom_call.1} parent=5 // pred_check_branch
        %144 = sbr.rel (%p141) target = $region12
      $region11: #{tpu_custom_call.1} parent=5 // pred_region
        %s145 = ssub.s32 %s16, 1
        // Predicated region
        $region13: #{tpu_custom_call.1} parent=11 // pred_check
          %p146 = pneg %p75
        $region14: #{tpu_custom_call.1} parent=11 // pred_check_branch
          %148 = sbr.rel (%p146) target = $region16
        $region15: #{tpu_custom_call.1} parent=11 // pred_region
          _
        $region16: #{tpu_custom_call.1} parent=11 // pred_fallthru
          _
      $region12: #{tpu_custom_call.1} parent=5 // pred_fallthru
        _
      %p149 = scmp.lt.s32.totalorder %s16, 2
      // Predicated region
      $region17: #{tpu_custom_call.1} parent=5 // pred_check
        %p150 = pneg %p149
      $region18: #{tpu_custom_call.1} parent=5 // pred_check_branch
        %152 = sbr.rel (%p150) target = $region20
      $region19: #{tpu_custom_call.1} parent=5 // pred_region
        // Predicated region
        $region21: #{tpu_custom_call.1} parent=19 // pred_check
          %p153 = pneg %p48
        $region22: #{tpu_custom_call.1} parent=19 // pred_check_branch
          %155 = sbr.rel (%p153) target = $region24
        $region23: #{tpu_custom_call.1} parent=19 // pred_region
          %p156 = scmp.lt.s32.totalorder %s23, 1
          %s157 = scalar_select %p156, %s23, 1
          %s158 = smul.addr %s157, 54
          %s159 = smul.addr %s158, 4
          %s160 = scalar_lea.vmem %s0, %s159
        $region24: #{tpu_custom_call.1} parent=19 // pred_fallthru
          _
      $region20: #{tpu_custom_call.1} parent=5 // pred_fallthru
        _
      %p161 = scmp.le.s32.totalorder 1, %s16
      %p162 = scmp.lt.s32.totalorder %s16, 3
      %p163 = pnand %p161, %p162
      %p164 = pneg %p163
      // Predicated region
      $region25: #{tpu_custom_call.1} parent=5 // pred_check
        _
      $region26: #{tpu_custom_call.1} parent=5 // pred_check_branch
        %166 = sbr.rel (%p163) target = $region28
      $region27: #{tpu_custom_call.1} parent=5 // pred_region
        %s167 = ssub.s32 %s16, 1
        %p168 = scmp.lt.s32.totalorder %s25, 1
        %s169 = scalar_select %p168, %s25, 1
        %s170 = smul.addr %s169, 54
        %s171 = smul.addr %s170, 4
        %s172 = scalar_lea.vmem %s0, %s171
        %p173 = pneg %p54
        %p174 = pneg %p51
        %p175 = pneg %p75
        %p176 = pneg %p72
        %p177 = pneg %p103
        %p178 = pneg %p100
        %s179 = sand.u32 %s90, 1
        %s180 = scalar_lea.sflag [#allocation4], %s179
        %s181 = sand.u32 %s90, 1
        %s182 = smul.addr %s181, 128
        %s183 = scalar_lea.vmem [#allocation3], %s182
        %p184 = pneg %p131
        %p185 = pneg %p128
        %s186 = sand.u32 %s118, 1
        %s187 = scalar_lea.sflag [#allocation6], %s186
        %s188 = sand.u32 %s118, 1
        %s189 = smul.addr %s188, 2
        %s190 = scalar_lea.vmem [#allocation5], %s189
        %p191 = scmp.lt.s32.totalorder %s25, 1
        %s192 = scalar_select %p191, %s25, 1
        %s193 = smul.addr %s192, 54
        %s194 = smul.addr %s193, 4
        %s195 = scalar_lea.vmem %s0, %s194
        %s196 = smul.u32 32, %s26
        %s198 = smul.u32 %s26, 16
        %s199 = smul.u32 %s198, 3
        %s200 = smul.addr %s199, 4
        %s201 = scalar_lea.vmem %s195, %s200
        %v202 = vld [vmem:[%s201] sm:$0xf]
        %v203 = vld [vmem:[%s201 + $0x4] sm:$0xf]
        %v204 = vld [vmem:[%s201 + $0x8] sm:$0x1]
        %v205 = vld [vmem:[%s201 + $0xc] sm:$0xf]
        %v206 = vld [vmem:[%s201 + $0x10] sm:$0xf]
        %v207 = vld [vmem:[%s201 + $0x14] sm:$0x1]
        %v208 = vld [vmem:[%s201 + $0x18] sm:$0xf]
        %v209 = vld [vmem:[%s201 + $0x1c] sm:$0xf]
        %v210 = vld [vmem:[%s201 + $0x20] sm:$0x1]
        %v211 = vld [vmem:[%s201 + $0x24] sm:$0xf]
        %v212 = vld [vmem:[%s201 + $0x28] sm:$0xf]
        %v213 = vld [vmem:[%s201 + $0x2c] sm:$0x1]
        %v214 = vld [vmem:[%s201 + $0x30] sm:$0xf]
        %v215 = vld [vmem:[%s201 + $0x34] sm:$0xf]
        %v216 = vld [vmem:[%s201 + $0x38] sm:$0x1]
        %v217 = vld [vmem:[%s201 + $0x3c] sm:$0xf]
        %v218 = vld [vmem:[%s201 + $0x40] sm:$0xf]
        %v219 = vld [vmem:[%s201 + $0x44] sm:$0x1]
        %v220 = vld [vmem:[%s201 + $0x48] sm:$0xf]
        %v221 = vld [vmem:[%s201 + $0x4c] sm:$0xf]
        %v222 = vld [vmem:[%s201 + $0x50] sm:$0x1]
        %v223 = vld [vmem:[%s201 + $0x54] sm:$0xf]
        %v224 = vld [vmem:[%s201 + $0x58] sm:$0xf]
        %v225 = vld [vmem:[%s201 + $0x5c] sm:$0x1]
        %v226 = vld [vmem:[%s201 + $0x60] sm:$0xf]
        %v227 = vld [vmem:[%s201 + $0x64] sm:$0xf]
        %v228 = vld [vmem:[%s201 + $0x68] sm:$0x1]
        %v229 = vld [vmem:[%s201 + $0x6c] sm:$0xf]
        %v230 = vld [vmem:[%s201 + $0x70] sm:$0xf]
        %v231 = vld [vmem:[%s201 + $0x74] sm:$0x1]
        %v232 = vld [vmem:[%s201 + $0x78] sm:$0xf]
        %v233 = vld [vmem:[%s201 + $0x7c] sm:$0xf]
        %v234 = vld [vmem:[%s201 + $0x80] sm:$0x1]
        %v235 = vld [vmem:[%s201 + $0x84] sm:$0xf]
        %v236 = vld [vmem:[%s201 + $0x88] sm:$0xf]
        %v237 = vld [vmem:[%s201 + $0x8c] sm:$0x1]
        %v238 = vld [vmem:[%s201 + $0x90] sm:$0xf]
        %v239 = vld [vmem:[%s201 + $0x94] sm:$0xf]
        %v240 = vld [vmem:[%s201 + $0x98] sm:$0x1]
        %v241 = vld [vmem:[%s201 + $0x9c] sm:$0xf]
        %v242 = vld [vmem:[%s201 + $0xa0] sm:$0xf]
        %v243 = vld [vmem:[%s201 + $0xa4] sm:$0x1]
        %v244 = vld [vmem:[%s201 + $0xa8] sm:$0xf]
        %v245 = vld [vmem:[%s201 + $0xac] sm:$0xf]
        %v246 = vld [vmem:[%s201 + $0xb0] sm:$0x1]
        %v247 = vld [vmem:[%s201 + $0xb4] sm:$0xf]
        %v248 = vld [vmem:[%s201 + $0xb8] sm:$0xf]
        %v249 = vld [vmem:[%s201 + $0xbc] sm:$0x1]
        %v250 = vld [vmem:[%s201 + $0xc0] sm:$0xf]
        %v251 = vld [vmem:[%s201 + $0xc4] sm:$0xf]
        %v252 = vld [vmem:[%s201 + $0xc8] sm:$0x1]
        %v253 = vld [vmem:[%s201 + $0xcc] sm:$0xf]
        %v254 = vld [vmem:[%s201 + $0xd0] sm:$0xf]
        %v255 = vld [vmem:[%s201 + $0xd4] sm:$0x1]
        %vm256 = vcmask 1047840
        %257 = vst.msk [vmem:[#allocation2] sm:$0xff] %vm256, 0
        %258 = vst.msk [vmem:[#allocation2 + $0x8] sm:$0xff] %vm256, 0
        %259 = vst.msk [vmem:[#allocation2 + $0x10] sm:$0xff] %vm256, 0
        %260 = vst.msk [vmem:[#allocation2 + $0x18] sm:$0xff] %vm256, 0
        %261 = vst.msk [vmem:[#allocation2 + $0x20] sm:$0xff] %vm256, 0
        %262 = vst.msk [vmem:[#allocation2 + $0x28] sm:$0xff] %vm256, 0
        %263 = vst.msk [vmem:[#allocation2 + $0x30] sm:$0xff] %vm256, 0
        %264 = vst.msk [vmem:[#allocation2 + $0x38] sm:$0xff] %vm256, 0
        %265 = vst.msk [vmem:[#allocation2 + $0x40] sm:$0xff] %vm256, 0
        %266 = vst.msk [vmem:[#allocation2 + $0x48] sm:$0xff] %vm256, 0
        %267 = vst.msk [vmem:[#allocation2 + $0x50] sm:$0xff] %vm256, 0
        %268 = vst.msk [vmem:[#allocation2 + $0x58] sm:$0xff] %vm256, 0
        %269 = vst.msk [vmem:[#allocation2 + $0x60] sm:$0xff] %vm256, 0
        %270 = vst.msk [vmem:[#allocation2 + $0x68] sm:$0xff] %vm256, 0
        %271 = vst.msk [vmem:[#allocation2 + $0x70] sm:$0xff] %vm256, 0
        %272 = vst.msk [vmem:[#allocation2 + $0x78] sm:$0xff] %vm256, 0
        %v305 = vunpack.c.l.b16 %v202
        %v306 = vunpack.c.l.b16 %v203
        %v307 = vunpack.c.l.b16 %v205
        %v308 = vunpack.c.l.b16 %v206
        %v309 = vunpack.c.l.b16 %v208
        %v310 = vunpack.c.l.b16 %v209
        %v311 = vunpack.c.l.b16 %v211
        %v312 = vunpack.c.l.b16 %v212
        %v313 = vunpack.c.l.b16 %v214
        %v314 = vunpack.c.l.b16 %v215
        %v315 = vunpack.c.l.b16 %v217
        %v316 = vunpack.c.l.b16 %v218
        %v317 = vunpack.c.l.b16 %v220
        %v318 = vunpack.c.l.b16 %v221
        %v319 = vunpack.c.l.b16 %v223
        %v320 = vunpack.c.l.b16 %v224
        %v321 = vunpack.c.l.b16 %v226
        %v322 = vunpack.c.l.b16 %v227
        %v323 = vunpack.c.l.b16 %v229
        %v324 = vunpack.c.l.b16 %v230
        %v325 = vunpack.c.l.b16 %v232
        %v326 = vunpack.c.l.b16 %v233
        %v327 = vunpack.c.l.b16 %v235
        %v328 = vunpack.c.l.b16 %v236
        %v329 = vunpack.c.l.b16 %v238
        %v330 = vunpack.c.l.b16 %v239
        %v331 = vunpack.c.l.b16 %v241
        %v332 = vunpack.c.l.b16 %v242
        %v333 = vunpack.c.l.b16 %v244
        %v334 = vunpack.c.l.b16 %v245
        %v335 = vunpack.c.l.b16 %v247
        %v336 = vunpack.c.l.b16 %v248
        %v337 = vpack.c.b16 %v306, %v305
        %v338 = vpack.c.b16 %v308, %v307
        %v339 = vpack.c.b16 %v310, %v309
        %v340 = vpack.c.b16 %v312, %v311
        %v341 = vpack.c.b16 %v314, %v313
        %v342 = vpack.c.b16 %v316, %v315
        %v343 = vpack.c.b16 %v318, %v317
        %v344 = vpack.c.b16 %v320, %v319
        %v345 = vpack.c.b16 %v322, %v321
        %v346 = vpack.c.b16 %v324, %v323
        %v347 = vpack.c.b16 %v326, %v325
        %v348 = vpack.c.b16 %v328, %v327
        %v349 = vpack.c.b16 %v330, %v329
        %v350 = vpack.c.b16 %v332, %v331
        %v351 = vpack.c.b16 %v334, %v333
        %v352 = vpack.c.b16 %v336, %v335
        %vm369 = vcmask 31744
        %370 = vst.msk [vmem:[#allocation2] sm:$0xff] %vm369, %v337
        %371 = vst.msk [vmem:[#allocation2 + $0x8] sm:$0xff] %vm369, %v338
        %372 = vst.msk [vmem:[#allocation2 + $0x10] sm:$0xff] %vm369, %v339
        %373 = vst.msk [vmem:[#allocation2 + $0x18] sm:$0xff] %vm369, %v340
        %374 = vst.msk [vmem:[#allocation2 + $0x20] sm:$0xff] %vm369, %v341
        %375 = vst.msk [vmem:[#allocation2 + $0x28] sm:$0xff] %vm369, %v342
        %376 = vst.msk [vmem:[#allocation2 + $0x30] sm:$0xff] %vm369, %v343
        %377 = vst.msk [vmem:[#allocation2 + $0x38] sm:$0xff] %vm369, %v344
        %378 = vst.msk [vmem:[#allocation2 + $0x40] sm:$0xff] %vm369, %v345
        %379 = vst.msk [vmem:[#allocation2 + $0x48] sm:$0xff] %vm369, %v346
        %380 = vst.msk [vmem:[#allocation2 + $0x50] sm:$0xff] %vm369, %v347
        %381 = vst.msk [vmem:[#allocation2 + $0x58] sm:$0xff] %vm369, %v348
        %382 = vst.msk [vmem:[#allocation2 + $0x60] sm:$0xff] %vm369, %v349
        %383 = vst.msk [vmem:[#allocation2 + $0x68] sm:$0xff] %vm369, %v350
        %384 = vst.msk [vmem:[#allocation2 + $0x70] sm:$0xff] %vm369, %v351
        %385 = vst.msk [vmem:[#allocation2 + $0x78] sm:$0xff] %vm369, %v352
        %vm386 = vsmask.f32 3328
        %vm387 = vsmask.f32 7440
        %vm388 = vmor %vm386, %vm387
        %v390 = vshrl.u32 %v202, 16
        %v392 = vrot.slane %v390, 4
        %v393 = vshll.u32 %v202, 16
        %v395 = vrot.slane %v393, 5
        %v396 = vor.u32 %v392, %v395
        %v397 = vrot.slane %v396, 4
        %v399 = vshll.u32 %v203, 16
        %v401 = vrot.slane %v399, 5
        %v402 = vsel %vm388, %v397, %v401
        %v403 = vshrl.u32 %v203, 16
        %v405 = vrot.slane %v403, 4
        %v406 = vor.u32 %v405, %v401
        %v407 = vrot.slane %v406, 4
        %v409 = vshll.u32 %v204, 16
        %v411 = vrot.slane %v409, 5
        %v412 = vsel %vm388, %v407, %v411
        %v414 = vshrl.u32 %v205, 16
        %v416 = vrot.slane %v414, 4
        %v417 = vshll.u32 %v205, 16
        %v419 = vrot.slane %v417, 5
        %v420 = vor.u32 %v416, %v419
        %v421 = vrot.slane %v420, 4
        %v423 = vshll.u32 %v206, 16
        %v425 = vrot.slane %v423, 5
        %v426 = vsel %vm388, %v421, %v425
        %v427 = vshrl.u32 %v206, 16
        %v429 = vrot.slane %v427, 4
        %v430 = vor.u32 %v429, %v425
        %v431 = vrot.slane %v430, 4
        %v433 = vshll.u32 %v207, 16
        %v435 = vrot.slane %v433, 5
        %v436 = vsel %vm388, %v431, %v435
        %v438 = vshrl.u32 %v208, 16
        %v440 = vrot.slane %v438, 4
        %v441 = vshll.u32 %v208, 16
        %v443 = vrot.slane %v441, 5
        %v444 = vor.u32 %v440, %v443
        %v445 = vrot.slane %v444, 4
        %v447 = vshll.u32 %v209, 16
        %v449 = vrot.slane %v447, 5
        %v450 = vsel %vm388, %v445, %v449
        %v451 = vshrl.u32 %v209, 16
        %v453 = vrot.slane %v451, 4
        %v454 = vor.u32 %v453, %v449
        %v455 = vrot.slane %v454, 4
        %v457 = vshll.u32 %v210, 16
        %v459 = vrot.slane %v457, 5
        %v460 = vsel %vm388, %v455, %v459
        %v462 = vshrl.u32 %v211, 16
        %v464 = vrot.slane %v462, 4
        %v465 = vshll.u32 %v211, 16
        %v467 = vrot.slane %v465, 5
        %v468 = vor.u32 %v464, %v467
        %v469 = vrot.slane %v468, 4
        %v471 = vshll.u32 %v212, 16
        %v473 = vrot.slane %v471, 5
        %v474 = vsel %vm388, %v469, %v473
        %v475 = vshrl.u32 %v212, 16
        %v477 = vrot.slane %v475, 4
        %v478 = vor.u32 %v477, %v473
        %v479 = vrot.slane %v478, 4
        %v481 = vshll.u32 %v213, 16
        %v483 = vrot.slane %v481, 5
        %v484 = vsel %vm388, %v479, %v483
        %v486 = vshrl.u32 %v214, 16
        %v488 = vrot.slane %v486, 4
        %v489 = vshll.u32 %v214, 16
        %v491 = vrot.slane %v489, 5
        %v492 = vor.u32 %v488, %v491
        %v493 = vrot.slane %v492, 4
        %v495 = vshll.u32 %v215, 16
        %v497 = vrot.slane %v495, 5
        %v498 = vsel %vm388, %v493, %v497
        %v499 = vshrl.u32 %v215, 16
        %v501 = vrot.slane %v499, 4
        %v502 = vor.u32 %v501, %v497
        %v503 = vrot.slane %v502, 4
        %v505 = vshll.u32 %v216, 16
        %v507 = vrot.slane %v505, 5
        %v508 = vsel %vm388, %v503, %v507
        %v510 = vshrl.u32 %v217, 16
        %v512 = vrot.slane %v510, 4
        %v513 = vshll.u32 %v217, 16
        %v515 = vrot.slane %v513, 5
        %v516 = vor.u32 %v512, %v515
        %v517 = vrot.slane %v516, 4
        %v519 = vshll.u32 %v218, 16
        %v521 = vrot.slane %v519, 5
        %v522 = vsel %vm388, %v517, %v521
        %v523 = vshrl.u32 %v218, 16
        %v525 = vrot.slane %v523, 4
        %v526 = vor.u32 %v525, %v521
        %v527 = vrot.slane %v526, 4
        %v529 = vshll.u32 %v219, 16
        %v531 = vrot.slane %v529, 5
        %v532 = vsel %vm388, %v527, %v531
        %v534 = vshrl.u32 %v220, 16
        %v536 = vrot.slane %v534, 4
        %v537 = vshll.u32 %v220, 16
        %v539 = vrot.slane %v537, 5
        %v540 = vor.u32 %v536, %v539
        %v541 = vrot.slane %v540, 4
        %v543 = vshll.u32 %v221, 16
        %v545 = vrot.slane %v543, 5
        %v546 = vsel %vm388, %v541, %v545
        %v547 = vshrl.u32 %v221, 16
        %v549 = vrot.slane %v547, 4
        %v550 = vor.u32 %v549, %v545
        %v551 = vrot.slane %v550, 4
        %v553 = vshll.u32 %v222, 16
        %v555 = vrot.slane %v553, 5
        %v556 = vsel %vm388, %v551, %v555
        %v558 = vshrl.u32 %v223, 16
        %v560 = vrot.slane %v558, 4
        %v561 = vshll.u32 %v223, 16
        %v563 = vrot.slane %v561, 5
        %v564 = vor.u32 %v560, %v563
        %v565 = vrot.slane %v564, 4
        %v567 = vshll.u32 %v224, 16
        %v569 = vrot.slane %v567, 5
        %v570 = vsel %vm388, %v565, %v569
        %v571 = vshrl.u32 %v224, 16
        %v573 = vrot.slane %v571, 4
        %v574 = vor.u32 %v573, %v569
        %v575 = vrot.slane %v574, 4
        %v577 = vshll.u32 %v225, 16
        %v579 = vrot.slane %v577, 5
        %v580 = vsel %vm388, %v575, %v579
        %v582 = vshrl.u32 %v226, 16
        %v584 = vrot.slane %v582, 4
        %v585 = vshll.u32 %v226, 16
        %v587 = vrot.slane %v585, 5
        %v588 = vor.u32 %v584, %v587
        %v589 = vrot.slane %v588, 4
        %v591 = vshll.u32 %v227, 16
        %v593 = vrot.slane %v591, 5
        %v594 = vsel %vm388, %v589, %v593
        %v595 = vshrl.u32 %v227, 16
        %v597 = vrot.slane %v595, 4
        %v598 = vor.u32 %v597, %v593
        %v599 = vrot.slane %v598, 4
        %v601 = vshll.u32 %v228, 16
        %v603 = vrot.slane %v601, 5
        %v604 = vsel %vm388, %v599, %v603
        %v606 = vshrl.u32 %v229, 16
        %v608 = vrot.slane %v606, 4
        %v609 = vshll.u32 %v229, 16
        %v611 = vrot.slane %v609, 5
        %v612 = vor.u32 %v608, %v611
        %v613 = vrot.slane %v612, 4
        %v615 = vshll.u32 %v230, 16
        %v617 = vrot.slane %v615, 5
        %v618 = vsel %vm388, %v613, %v617
        %v619 = vshrl.u32 %v230, 16
        %v621 = vrot.slane %v619, 4
        %v622 = vor.u32 %v621, %v617
        %v623 = vrot.slane %v622, 4
        %v625 = vshll.u32 %v231, 16
        %v627 = vrot.slane %v625, 5
        %v628 = vsel %vm388, %v623, %v627
        %v630 = vshrl.u32 %v232, 16
        %v632 = vrot.slane %v630, 4
        %v633 = vshll.u32 %v232, 16
        %v635 = vrot.slane %v633, 5
        %v636 = vor.u32 %v632, %v635
        %v637 = vrot.slane %v636, 4
        %v639 = vshll.u32 %v233, 16
        %v641 = vrot.slane %v639, 5
        %v642 = vsel %vm388, %v637, %v641
        %v643 = vshrl.u32 %v233, 16
        %v645 = vrot.slane %v643, 4
        %v646 = vor.u32 %v645, %v641
        %v647 = vrot.slane %v646, 4
        %v649 = vshll.u32 %v234, 16
        %v651 = vrot.slane %v649, 5
        %v652 = vsel %vm388, %v647, %v651
        %v654 = vshrl.u32 %v235, 16
        %v656 = vrot.slane %v654, 4
        %v657 = vshll.u32 %v235, 16
        %v659 = vrot.slane %v657, 5
        %v660 = vor.u32 %v656, %v659
        %v661 = vrot.slane %v660, 4
        %v663 = vshll.u32 %v236, 16
        %v665 = vrot.slane %v663, 5
        %v666 = vsel %vm388, %v661, %v665
        %v667 = vshrl.u32 %v236, 16
        %v669 = vrot.slane %v667, 4
        %v670 = vor.u32 %v669, %v665
        %v671 = vrot.slane %v670, 4
        %v673 = vshll.u32 %v237, 16
        %v675 = vrot.slane %v673, 5
        %v676 = vsel %vm388, %v671, %v675
        %v678 = vshrl.u32 %v238, 16
        %v680 = vrot.slane %v678, 4
        %v681 = vshll.u32 %v238, 16
        %v683 = vrot.slane %v681, 5
        %v684 = vor.u32 %v680, %v683
        %v685 = vrot.slane %v684, 4
        %v687 = vshll.u32 %v239, 16
        %v689 = vrot.slane %v687, 5
        %v690 = vsel %vm388, %v685, %v689
        %v691 = vshrl.u32 %v239, 16
        %v693 = vrot.slane %v691, 4
        %v694 = vor.u32 %v693, %v689
        %v695 = vrot.slane %v694, 4
        %v697 = vshll.u32 %v240, 16
        %v699 = vrot.slane %v697, 5
        %v700 = vsel %vm388, %v695, %v699
        %v702 = vshrl.u32 %v241, 16
        %v704 = vrot.slane %v702, 4
        %v705 = vshll.u32 %v241, 16
        %v707 = vrot.slane %v705, 5
        %v708 = vor.u32 %v704, %v707
        %v709 = vrot.slane %v708, 4
        %v711 = vshll.u32 %v242, 16
        %v713 = vrot.slane %v711, 5
        %v714 = vsel %vm388, %v709, %v713
        %v715 = vshrl.u32 %v242, 16
        %v717 = vrot.slane %v715, 4
        %v718 = vor.u32 %v717, %v713
        %v719 = vrot.slane %v718, 4
        %v721 = vshll.u32 %v243, 16
        %v723 = vrot.slane %v721, 5
        %v724 = vsel %vm388, %v719, %v723
        %v726 = vshrl.u32 %v244, 16
        %v728 = vrot.slane %v726, 4
        %v729 = vshll.u32 %v244, 16
        %v731 = vrot.slane %v729, 5
        %v732 = vor.u32 %v728, %v731
        %v733 = vrot.slane %v732, 4
        %v735 = vshll.u32 %v245, 16
        %v737 = vrot.slane %v735, 5
        %v738 = vsel %vm388, %v733, %v737
        %v739 = vshrl.u32 %v245, 16
        %v741 = vrot.slane %v739, 4
        %v742 = vor.u32 %v741, %v737
        %v743 = vrot.slane %v742, 4
        %v745 = vshll.u32 %v246, 16
        %v747 = vrot.slane %v745, 5
        %v748 = vsel %vm388, %v743, %v747
        %v750 = vshrl.u32 %v247, 16
        %v752 = vrot.slane %v750, 4
        %v753 = vshll.u32 %v247, 16
        %v755 = vrot.slane %v753, 5
        %v756 = vor.u32 %v752, %v755
        %v757 = vrot.slane %v756, 4
        %v759 = vshll.u32 %v248, 16
        %v761 = vrot.slane %v759, 5
        %v762 = vsel %vm388, %v757, %v761
        %v763 = vshrl.u32 %v248, 16
        %v765 = vrot.slane %v763, 4
        %v766 = vor.u32 %v765, %v761
        %v767 = vrot.slane %v766, 4
        %v769 = vshll.u32 %v249, 16
        %v771 = vrot.slane %v769, 5
        %v772 = vsel %vm388, %v767, %v771
        %v773 = vunpack.c.l.b16 %v402
        %v774 = vunpack.c.l.b16 %v412
        %v775 = vunpack.c.l.b16 %v426
        %v776 = vunpack.c.l.b16 %v436
        %v777 = vunpack.c.l.b16 %v450
        %v778 = vunpack.c.l.b16 %v460
        %v779 = vunpack.c.l.b16 %v474
        %v780 = vunpack.c.l.b16 %v484
        %v781 = vunpack.c.l.b16 %v498
        %v782 = vunpack.c.l.b16 %v508
        %v783 = vunpack.c.l.b16 %v522
        %v784 = vunpack.c.l.b16 %v532
        %v785 = vunpack.c.l.b16 %v546
        %v786 = vunpack.c.l.b16 %v556
        %v787 = vunpack.c.l.b16 %v570
        %v788 = vunpack.c.l.b16 %v580
        %v789 = vunpack.c.l.b16 %v594
        %v790 = vunpack.c.l.b16 %v604
        %v791 = vunpack.c.l.b16 %v618
        %v792 = vunpack.c.l.b16 %v628
        %v793 = vunpack.c.l.b16 %v642
        %v794 = vunpack.c.l.b16 %v652
        %v795 = vunpack.c.l.b16 %v666
        %v796 = vunpack.c.l.b16 %v676
        %v797 = vunpack.c.l.b16 %v690
        %v798 = vunpack.c.l.b16 %v700
        %v799 = vunpack.c.l.b16 %v714
        %v800 = vunpack.c.l.b16 %v724
        %v801 = vunpack.c.l.b16 %v738
        %v802 = vunpack.c.l.b16 %v748
        %v803 = vunpack.c.l.b16 %v762
        %v804 = vunpack.c.l.b16 %v772
        %v805 = vpack.c.b16 %v774, %v773
        %v806 = vpack.c.b16 %v776, %v775
        %v807 = vpack.c.b16 %v778, %v777
        %v808 = vpack.c.b16 %v780, %v779
        %v809 = vpack.c.b16 %v782, %v781
        %v810 = vpack.c.b16 %v784, %v783
        %v811 = vpack.c.b16 %v786, %v785
        %v812 = vpack.c.b16 %v788, %v787
        %v813 = vpack.c.b16 %v790, %v789
        %v814 = vpack.c.b16 %v792, %v791
        %v815 = vpack.c.b16 %v794, %v793
        %v816 = vpack.c.b16 %v796, %v795
        %v817 = vpack.c.b16 %v798, %v797
        %v818 = vpack.c.b16 %v800, %v799
        %v819 = vpack.c.b16 %v802, %v801
        %v820 = vpack.c.b16 %v804, %v803
        %821 = vrot.lane.b32.xlu0 %v805, 4
        %v822 = vpop.permute.xlu0 %821
        %823 = vrot.lane.b32.xlu0 %v806, 4
        %v824 = vpop.permute.xlu0 %823
        %825 = vrot.lane.b32.xlu0 %v807, 4
        %v826 = vpop.permute.xlu0 %825
        %827 = vrot.lane.b32.xlu0 %v808, 4
        %v828 = vpop.permute.xlu0 %827
        %829 = vrot.lane.b32.xlu0 %v809, 4
        %v830 = vpop.permute.xlu0 %829
        %831 = vrot.lane.b32.xlu0 %v810, 4
        %v832 = vpop.permute.xlu0 %831
        %833 = vrot.lane.b32.xlu0 %v811, 4
        %v834 = vpop.permute.xlu0 %833
        %835 = vrot.lane.b32.xlu0 %v812, 4
        %v836 = vpop.permute.xlu0 %835
        %837 = vrot.lane.b32.xlu0 %v813, 4
        %v838 = vpop.permute.xlu0 %837
        %839 = vrot.lane.b32.xlu0 %v814, 4
        %v840 = vpop.permute.xlu0 %839
        %841 = vrot.lane.b32.xlu0 %v815, 4
        %v842 = vpop.permute.xlu0 %841
        %843 = vrot.lane.b32.xlu0 %v816, 4
        %v844 = vpop.permute.xlu0 %843
        %845 = vrot.lane.b32.xlu0 %v817, 4
        %v846 = vpop.permute.xlu0 %845
        %847 = vrot.lane.b32.xlu0 %v818, 4
        %v848 = vpop.permute.xlu0 %847
        %849 = vrot.lane.b32.xlu0 %v819, 4
        %v850 = vpop.permute.xlu0 %849
        %851 = vrot.lane.b32.xlu0 %v820, 4
        %v852 = vpop.permute.xlu0 %851
        %vm869 = vcmask 64544
        %870 = vst.msk [vmem:[#allocation2] sm:$0xff] %vm869, %v822
        %871 = vst.msk [vmem:[#allocation2 + $0x8] sm:$0xff] %vm869, %v824
        %872 = vst.msk [vmem:[#allocation2 + $0x10] sm:$0xff] %vm869, %v826
        %873 = vst.msk [vmem:[#allocation2 + $0x18] sm:$0xff] %vm869, %v828
        %874 = vst.msk [vmem:[#allocation2 + $0x20] sm:$0xff] %vm869, %v830
        %875 = vst.msk [vmem:[#allocation2 + $0x28] sm:$0xff] %vm869, %v832
        %876 = vst.msk [vmem:[#allocation2 + $0x30] sm:$0xff] %vm869, %v834
        %877 = vst.msk [vmem:[#allocation2 + $0x38] sm:$0xff] %vm869, %v836
        %878 = vst.msk [vmem:[#allocation2 + $0x40] sm:$0xff] %vm869, %v838
        %879 = vst.msk [vmem:[#allocation2 + $0x48] sm:$0xff] %vm869, %v840
        %880 = vst.msk [vmem:[#allocation2 + $0x50] sm:$0xff] %vm869, %v842
        %881 = vst.msk [vmem:[#allocation2 + $0x58] sm:$0xff] %vm869, %v844
        %882 = vst.msk [vmem:[#allocation2 + $0x60] sm:$0xff] %vm869, %v846
        %883 = vst.msk [vmem:[#allocation2 + $0x68] sm:$0xff] %vm869, %v848
        %884 = vst.msk [vmem:[#allocation2 + $0x70] sm:$0xff] %vm869, %v850
        %885 = vst.msk [vmem:[#allocation2 + $0x78] sm:$0xff] %vm869, %v852
        %vm902 = vcmask 1042432
        %vm903 = vcmask 1046532
        %vm904 = vmor %vm902, %vm903
        %v905 = vrot.slane %v202, 5
        %v906 = vrot.slane %v905, 4
        %v907 = vrot.slane %v203, 5
        %v908 = vsel %vm904, %v906, %v907
        %v909 = vrot.slane %v907, 4
        %v910 = vrot.slane %v204, 5
        %v911 = vsel %vm904, %v909, %v910
        %v912 = vrot.slane %v205, 5
        %v913 = vrot.slane %v912, 4
        %v914 = vrot.slane %v206, 5
        %v915 = vsel %vm904, %v913, %v914
        %v916 = vrot.slane %v914, 4
        %v917 = vrot.slane %v207, 5
        %v918 = vsel %vm904, %v916, %v917
        %v919 = vrot.slane %v208, 5
        %v920 = vrot.slane %v919, 4
        %v921 = vrot.slane %v209, 5
        %v922 = vsel %vm904, %v920, %v921
        %v923 = vrot.slane %v921, 4
        %v924 = vrot.slane %v210, 5
        %v925 = vsel %vm904, %v923, %v924
        %v926 = vrot.slane %v211, 5
        %v927 = vrot.slane %v926, 4
        %v928 = vrot.slane %v212, 5
        %v929 = vsel %vm904, %v927, %v928
        %v930 = vrot.slane %v928, 4
        %v931 = vrot.slane %v213, 5
        %v932 = vsel %vm904, %v930, %v931
        %v933 = vrot.slane %v214, 5
        %v934 = vrot.slane %v933, 4
        %v935 = vrot.slane %v215, 5
        %v936 = vsel %vm904, %v934, %v935
        %v937 = vrot.slane %v935, 4
        %v938 = vrot.slane %v216, 5
        %v939 = vsel %vm904, %v937, %v938
        %v940 = vrot.slane %v217, 5
        %v941 = vrot.slane %v940, 4
        %v942 = vrot.slane %v218, 5
        %v943 = vsel %vm904, %v941, %v942
        %v944 = vrot.slane %v942, 4
        %v945 = vrot.slane %v219, 5
        %v946 = vsel %vm904, %v944, %v945
        %v947 = vrot.slane %v220, 5
        %v948 = vrot.slane %v947, 4
        %v949 = vrot.slane %v221, 5
        %v950 = vsel %vm904, %v948, %v949
        %v951 = vrot.slane %v949, 4
        %v952 = vrot.slane %v222, 5
        %v953 = vsel %vm904, %v951, %v952
        %v954 = vrot.slane %v223, 5
        %v955 = vrot.slane %v954, 4
        %v956 = vrot.slane %v224, 5
        %v957 = vsel %vm904, %v955, %v956
        %v958 = vrot.slane %v956, 4
        %v959 = vrot.slane %v225, 5
        %v960 = vsel %vm904, %v958, %v959
        %v961 = vrot.slane %v226, 5
        %v962 = vrot.slane %v961, 4
        %v963 = vrot.slane %v227, 5
        %v964 = vsel %vm904, %v962, %v963
        %v965 = vrot.slane %v963, 4
        %v966 = vrot.slane %v228, 5
        %v967 = vsel %vm904, %v965, %v966
        %v968 = vrot.slane %v229, 5
        %v969 = vrot.slane %v968, 4
        %v970 = vrot.slane %v230, 5
        %v971 = vsel %vm904, %v969, %v970
        %v972 = vrot.slane %v970, 4
        %v973 = vrot.slane %v231, 5
        %v974 = vsel %vm904, %v972, %v973
        %v975 = vrot.slane %v232, 5
        %v976 = vrot.slane %v975, 4
        %v977 = vrot.slane %v233, 5
        %v978 = vsel %vm904, %v976, %v977
        %v979 = vrot.slane %v977, 4
        %v980 = vrot.slane %v234, 5
        %v981 = vsel %vm904, %v979, %v980
        %v982 = vrot.slane %v235, 5
        %v983 = vrot.slane %v982, 4
        %v984 = vrot.slane %v236, 5
        %v985 = vsel %vm904, %v983, %v984
        %v986 = vrot.slane %v984, 4
        %v987 = vrot.slane %v237, 5
        %v988 = vsel %vm904, %v986, %v987
        %v989 = vrot.slane %v238, 5
        %v990 = vrot.slane %v989, 4
        %v991 = vrot.slane %v239, 5
        %v992 = vsel %vm904, %v990, %v991
        %v993 = vrot.slane %v991, 4
        %v994 = vrot.slane %v240, 5
        %v995 = vsel %vm904, %v993, %v994
        %v996 = vrot.slane %v241, 5
        %v997 = vrot.slane %v996, 4
        %v998 = vrot.slane %v242, 5
        %v999 = vsel %vm904, %v997, %v998
        %v1000 = vrot.slane %v998, 4
        %v1001 = vrot.slane %v243, 5
        %v1002 = vsel %vm904, %v1000, %v1001
        %v1003 = vrot.slane %v244, 5
        %v1004 = vrot.slane %v1003, 4
        %v1005 = vrot.slane %v245, 5
        %v1006 = vsel %vm904, %v1004, %v1005
        %v1007 = vrot.slane %v1005, 4
        %v1008 = vrot.slane %v246, 5
        %v1009 = vsel %vm904, %v1007, %v1008
        %v1010 = vrot.slane %v247, 5
        %v1011 = vrot.slane %v1010, 4
        %v1012 = vrot.slane %v248, 5
        %v1013 = vsel %vm904, %v1011, %v1012
        %v1014 = vrot.slane %v1012, 4
        %v1015 = vrot.slane %v249, 5
        %v1016 = vsel %vm904, %v1014, %v1015
        %v1017 = vunpack.c.l.b16 %v908
        %v1018 = vunpack.c.l.b16 %v911
        %v1019 = vunpack.c.l.b16 %v915
        %v1020 = vunpack.c.l.b16 %v918
        %v1021 = vunpack.c.l.b16 %v922
        %v1022 = vunpack.c.l.b16 %v925
        %v1023 = vunpack.c.l.b16 %v929
        %v1024 = vunpack.c.l.b16 %v932
        %v1025 = vunpack.c.l.b16 %v936
        %v1026 = vunpack.c.l.b16 %v939
        %v1027 = vunpack.c.l.b16 %v943
        %v1028 = vunpack.c.l.b16 %v946
        %v1029 = vunpack.c.l.b16 %v950
        %v1030 = vunpack.c.l.b16 %v953
        %v1031 = vunpack.c.l.b16 %v957
        %v1032 = vunpack.c.l.b16 %v960
        %v1033 = vunpack.c.l.b16 %v964
        %v1034 = vunpack.c.l.b16 %v967
        %v1035 = vunpack.c.l.b16 %v971
        %v1036 = vunpack.c.l.b16 %v974
        %v1037 = vunpack.c.l.b16 %v978
        %v1038 = vunpack.c.l.b16 %v981
        %v1039 = vunpack.c.l.b16 %v985
        %v1040 = vunpack.c.l.b16 %v988
        %v1041 = vunpack.c.l.b16 %v992
        %v1042 = vunpack.c.l.b16 %v995
        %v1043 = vunpack.c.l.b16 %v999
        %v1044 = vunpack.c.l.b16 %v1002
        %v1045 = vunpack.c.l.b16 %v1006
        %v1046 = vunpack.c.l.b16 %v1009
        %v1047 = vunpack.c.l.b16 %v1013
        %v1048 = vunpack.c.l.b16 %v1016
        %v1049 = vpack.c.b16 %v1018, %v1017
        %v1050 = vpack.c.b16 %v1020, %v1019
        %v1051 = vpack.c.b16 %v1022, %v1021
        %v1052 = vpack.c.b16 %v1024, %v1023
        %v1053 = vpack.c.b16 %v1026, %v1025
        %v1054 = vpack.c.b16 %v1028, %v1027
        %v1055 = vpack.c.b16 %v1030, %v1029
        %v1056 = vpack.c.b16 %v1032, %v1031
        %v1057 = vpack.c.b16 %v1034, %v1033
        %v1058 = vpack.c.b16 %v1036, %v1035
        %v1059 = vpack.c.b16 %v1038, %v1037
        %v1060 = vpack.c.b16 %v1040, %v1039
        %v1061 = vpack.c.b16 %v1042, %v1041
        %v1062 = vpack.c.b16 %v1044, %v1043
        %v1063 = vpack.c.b16 %v1046, %v1045
        %v1064 = vpack.c.b16 %v1048, %v1047
        %1065 = vrot.lane.b32.xlu0 %v1049, 8
        %v1066 = vpop.permute.xlu0 %1065
        %1067 = vrot.lane.b32.xlu0 %v1050, 8
        %v1068 = vpop.permute.xlu0 %1067
        %1069 = vrot.lane.b32.xlu0 %v1051, 8
        %v1070 = vpop.permute.xlu0 %1069
        %1071 = vrot.lane.b32.xlu0 %v1052, 8
        %v1072 = vpop.permute.xlu0 %1071
        %1073 = vrot.lane.b32.xlu0 %v1053, 8
        %v1074 = vpop.permute.xlu0 %1073
        %1075 = vrot.lane.b32.xlu0 %v1054, 8
        %v1076 = vpop.permute.xlu0 %1075
        %1077 = vrot.lane.b32.xlu0 %v1055, 8
        %v1078 = vpop.permute.xlu0 %1077
        %1079 = vrot.lane.b32.xlu0 %v1056, 8
        %v1080 = vpop.permute.xlu0 %1079
        %1081 = vrot.lane.b32.xlu0 %v1057, 8
        %v1082 = vpop.permute.xlu0 %1081
        %1083 = vrot.lane.b32.xlu0 %v1058, 8
        %v1084 = vpop.permute.xlu0 %1083
        %1085 = vrot.lane.b32.xlu0 %v1059, 8
        %v1086 = vpop.permute.xlu0 %1085
        %1087 = vrot.lane.b32.xlu0 %v1060, 8
        %v1088 = vpop.permute.xlu0 %1087
        %1089 = vrot.lane.b32.xlu0 %v1061, 8
        %v1090 = vpop.permute.xlu0 %1089
        %1091 = vrot.lane.b32.xlu0 %v1062, 8
        %v1092 = vpop.permute.xlu0 %1091
        %1093 = vrot.lane.b32.xlu0 %v1063, 8
        %v1094 = vpop.permute.xlu0 %1093
        %1095 = vrot.lane.b32.xlu0 %v1064, 8
        %v1096 = vpop.permute.xlu0 %1095
        %vm1113 = vcmask 97344
        %1114 = vst.msk [vmem:[#allocation2] sm:$0xff] %vm1113, %v1066
        %1115 = vst.msk [vmem:[#allocation2 + $0x8] sm:$0xff] %vm1113, %v1068
        %1116 = vst.msk [vmem:[#allocation2 + $0x10] sm:$0xff] %vm1113, %v1070
        %1117 = vst.msk [vmem:[#allocation2 + $0x18] sm:$0xff] %vm1113, %v1072
        %1118 = vst.msk [vmem:[#allocation2 + $0x20] sm:$0xff] %vm1113, %v1074
        %1119 = vst.msk [vmem:[#allocation2 + $0x28] sm:$0xff] %vm1113, %v1076
        %1120 = vst.msk [vmem:[#allocation2 + $0x30] sm:$0xff] %vm1113, %v1078
        %1121 = vst.msk [vmem:[#allocation2 + $0x38] sm:$0xff] %vm1113, %v1080
        %1122 = vst.msk [vmem:[#allocation2 + $0x40] sm:$0xff] %vm1113, %v1082
        %1123 = vst.msk [vmem:[#allocation2 + $0x48] sm:$0xff] %vm1113, %v1084
        %1124 = vst.msk [vmem:[#allocation2 + $0x50] sm:$0xff] %vm1113, %v1086
        %1125 = vst.msk [vmem:[#allocation2 + $0x58] sm:$0xff] %vm1113, %v1088
        %1126 = vst.msk [vmem:[#allocation2 + $0x60] sm:$0xff] %vm1113, %v1090
        %1127 = vst.msk [vmem:[#allocation2 + $0x68] sm:$0xff] %vm1113, %v1092
        %1128 = vst.msk [vmem:[#allocation2 + $0x70] sm:$0xff] %vm1113, %v1094
        %1129 = vst.msk [vmem:[#allocation2 + $0x78] sm:$0xff] %vm1113, %v1096
        %v1132 = vunpack.c.l.b16 %v250
        %v1133 = vunpack.c.l.b16 %v251
        %v1134 = vpack.c.b16 %v1133, %v1132
        %1135 = vrot.lane.b32.xlu0 %v338, 12
        %v1136 = vpop.permute.xlu0 %1135
        %1137 = vrot.lane.b32.xlu0 %v339, 12
        %v1138 = vpop.permute.xlu0 %1137
        %1139 = vrot.lane.b32.xlu0 %v340, 12
        %v1140 = vpop.permute.xlu0 %1139
        %1141 = vrot.lane.b32.xlu0 %v341, 12
        %v1142 = vpop.permute.xlu0 %1141
        %1143 = vrot.lane.b32.xlu0 %v342, 12
        %v1144 = vpop.permute.xlu0 %1143
        %1145 = vrot.lane.b32.xlu0 %v343, 12
        %v1146 = vpop.permute.xlu0 %1145
        %1147 = vrot.lane.b32.xlu0 %v344, 12
        %v1148 = vpop.permute.xlu0 %1147
        %1149 = vrot.lane.b32.xlu0 %v345, 12
        %v1150 = vpop.permute.xlu0 %1149
        %1151 = vrot.lane.b32.xlu0 %v346, 12
        %v1152 = vpop.permute.xlu0 %1151
        %1153 = vrot.lane.b32.xlu0 %v347, 12
        %v1154 = vpop.permute.xlu0 %1153
        %1155 = vrot.lane.b32.xlu0 %v348, 12
        %v1156 = vpop.permute.xlu0 %1155
        %1157 = vrot.lane.b32.xlu0 %v349, 12
        %v1158 = vpop.permute.xlu0 %1157
        %1159 = vrot.lane.b32.xlu0 %v350, 12
        %v1160 = vpop.permute.xlu0 %1159
        %1161 = vrot.lane.b32.xlu0 %v351, 12
        %v1162 = vpop.permute.xlu0 %1161
        %1163 = vrot.lane.b32.xlu0 %v352, 12
        %v1164 = vpop.permute.xlu0 %1163
        %1165 = vrot.lane.b32.xlu0 %v1134, 12
        %v1166 = vpop.permute.xlu0 %1165
        %vm1183 = vcmask 130144
        %1184 = vst.msk [vmem:[#allocation2] sm:$0xff] %vm1183, %v1136
        %1185 = vst.msk [vmem:[#allocation2 + $0x8] sm:$0xff] %vm1183, %v1138
        %1186 = vst.msk [vmem:[#allocation2 + $0x10] sm:$0xff] %vm1183, %v1140
        %1187 = vst.msk [vmem:[#allocation2 + $0x18] sm:$0xff] %vm1183, %v1142
        %1188 = vst.msk [vmem:[#allocation2 + $0x20] sm:$0xff] %vm1183, %v1144
        %1189 = vst.msk [vmem:[#allocation2 + $0x28] sm:$0xff] %vm1183, %v1146
        %1190 = vst.msk [vmem:[#allocation2 + $0x30] sm:$0xff] %vm1183, %v1148
        %1191 = vst.msk [vmem:[#allocation2 + $0x38] sm:$0xff] %vm1183, %v1150
        %1192 = vst.msk [vmem:[#allocation2 + $0x40] sm:$0xff] %vm1183, %v1152
        %1193 = vst.msk [vmem:[#allocation2 + $0x48] sm:$0xff] %vm1183, %v1154
        %1194 = vst.msk [vmem:[#allocation2 + $0x50] sm:$0xff] %vm1183, %v1156
        %1195 = vst.msk [vmem:[#allocation2 + $0x58] sm:$0xff] %vm1183, %v1158
        %1196 = vst.msk [vmem:[#allocation2 + $0x60] sm:$0xff] %vm1183, %v1160
        %1197 = vst.msk [vmem:[#allocation2 + $0x68] sm:$0xff] %vm1183, %v1162
        %1198 = vst.msk [vmem:[#allocation2 + $0x70] sm:$0xff] %vm1183, %v1164
        %1199 = vst.msk [vmem:[#allocation2 + $0x78] sm:$0xff] %vm1183, %v1166
        %v1201 = vshrl.u32 %v250, 16
        %v1203 = vrot.slane %v1201, 4
        %v1204 = vshll.u32 %v250, 16
        %v1206 = vrot.slane %v1204, 5
        %v1207 = vor.u32 %v1203, %v1206
        %v1208 = vrot.slane %v1207, 4
        %v1210 = vshll.u32 %v251, 16
        %v1212 = vrot.slane %v1210, 5
        %v1213 = vsel %vm388, %v1208, %v1212
        %v1214 = vshrl.u32 %v251, 16
        %v1216 = vrot.slane %v1214, 4
        %v1217 = vor.u32 %v1216, %v1212
        %v1218 = vrot.slane %v1217, 4
        %v1220 = vshll.u32 %v252, 16
        %v1222 = vrot.slane %v1220, 5
        %v1223 = vsel %vm388, %v1218, %v1222
        %v1224 = vunpack.c.l.b16 %v1213
        %v1225 = vunpack.c.l.b16 %v1223
        %v1226 = vpack.c.b16 %v1225, %v1224
        %1227 = vrot.lane.b32.xlu0 %v806, 16
        %v1228 = vpop.permute.xlu0 %1227
        %1229 = vrot.lane.b32.xlu0 %v807, 16
        %v1230 = vpop.permute.xlu0 %1229
        %1231 = vrot.lane.b32.xlu0 %v808, 16
        %v1232 = vpop.permute.xlu0 %1231
        %1233 = vrot.lane.b32.xlu0 %v809, 16
        %v1234 = vpop.permute.xlu0 %1233
        %1235 = vrot.lane.b32.xlu0 %v810, 16
        %v1236 = vpop.permute.xlu0 %1235
        %1237 = vrot.lane.b32.xlu0 %v811, 16
        %v1238 = vpop.permute.xlu0 %1237
        %1239 = vrot.lane.b32.xlu0 %v812, 16
        %v1240 = vpop.permute.xlu0 %1239
        %1241 = vrot.lane.b32.xlu0 %v813, 16
        %v1242 = vpop.permute.xlu0 %1241
        %1243 = vrot.lane.b32.xlu0 %v814, 16
        %v1244 = vpop.permute.xlu0 %1243
        %1245 = vrot.lane.b32.xlu0 %v815, 16
        %v1246 = vpop.permute.xlu0 %1245
        %1247 = vrot.lane.b32.xlu0 %v816, 16
        %v1248 = vpop.permute.xlu0 %1247
        %1249 = vrot.lane.b32.xlu0 %v817, 16
        %v1250 = vpop.permute.xlu0 %1249
        %1251 = vrot.lane.b32.xlu0 %v818, 16
        %v1252 = vpop.permute.xlu0 %1251
        %1253 = vrot.lane.b32.xlu0 %v819, 16
        %v1254 = vpop.permute.xlu0 %1253
        %1255 = vrot.lane.b32.xlu0 %v820, 16
        %v1256 = vpop.permute.xlu0 %1255
        %1257 = vrot.lane.b32.xlu0 %v1226, 16
        %v1258 = vpop.permute.xlu0 %1257
        %vm1275 = vcmask 162944
        %1276 = vst.msk [vmem:[#allocation2] sm:$0xff] %vm1275, %v1228
        %1277 = vst.msk [vmem:[#allocation2 + $0x8] sm:$0xff] %vm1275, %v1230
        %1278 = vst.msk [vmem:[#allocation2 + $0x10] sm:$0xff] %vm1275, %v1232
        %1279 = vst.msk [vmem:[#allocation2 + $0x18] sm:$0xff] %vm1275, %v1234
        %1280 = vst.msk [vmem:[#allocation2 + $0x20] sm:$0xff] %vm1275, %v1236
        %1281 = vst.msk [vmem:[#allocation2 + $0x28] sm:$0xff] %vm1275, %v1238
        %1282 = vst.msk [vmem:[#allocation2 + $0x30] sm:$0xff] %vm1275, %v1240
        %1283 = vst.msk [vmem:[#allocation2 + $0x38] sm:$0xff] %vm1275, %v1242
        %1284 = vst.msk [vmem:[#allocation2 + $0x40] sm:$0xff] %vm1275, %v1244
        %1285 = vst.msk [vmem:[#allocation2 + $0x48] sm:$0xff] %vm1275, %v1246
        %1286 = vst.msk [vmem:[#allocation2 + $0x50] sm:$0xff] %vm1275, %v1248
        %1287 = vst.msk [vmem:[#allocation2 + $0x58] sm:$0xff] %vm1275, %v1250
        %1288 = vst.msk [vmem:[#allocation2 + $0x60] sm:$0xff] %vm1275, %v1252
        %1289 = vst.msk [vmem:[#allocation2 + $0x68] sm:$0xff] %vm1275, %v1254
        %1290 = vst.msk [vmem:[#allocation2 + $0x70] sm:$0xff] %vm1275, %v1256
        %1291 = vst.msk [vmem:[#allocation2 + $0x78] sm:$0xff] %vm1275, %v1258
        %v1293 = vrot.slane %v250, 5
        %v1294 = vrot.slane %v1293, 4
        %v1295 = vrot.slane %v251, 5
        %v1296 = vsel %vm904, %v1294, %v1295
        %v1297 = vrot.slane %v1295, 4
        %v1298 = vrot.slane %v252, 5
        %v1299 = vsel %vm904, %v1297, %v1298
        %v1300 = vunpack.c.l.b16 %v1296
        %v1301 = vunpack.c.l.b16 %v1299
        %v1302 = vpack.c.b16 %v1301, %v1300
        %1303 = vrot.lane.b32.xlu0 %v1050, 20
        %v1304 = vpop.permute.xlu0 %1303
        %1305 = vrot.lane.b32.xlu0 %v1051, 20
        %v1306 = vpop.permute.xlu0 %1305
        %1307 = vrot.lane.b32.xlu0 %v1052, 20
        %v1308 = vpop.permute.xlu0 %1307
        %1309 = vrot.lane.b32.xlu0 %v1053, 20
        %v1310 = vpop.permute.xlu0 %1309
        %1311 = vrot.lane.b32.xlu0 %v1054, 20
        %v1312 = vpop.permute.xlu0 %1311
        %1313 = vrot.lane.b32.xlu0 %v1055, 20
        %v1314 = vpop.permute.xlu0 %1313
        %1315 = vrot.lane.b32.xlu0 %v1056, 20
        %v1316 = vpop.permute.xlu0 %1315
        %1317 = vrot.lane.b32.xlu0 %v1057, 20
        %v1318 = vpop.permute.xlu0 %1317
        %1319 = vrot.lane.b32.xlu0 %v1058, 20
        %v1320 = vpop.permute.xlu0 %1319
        %1321 = vrot.lane.b32.xlu0 %v1059, 20
        %v1322 = vpop.permute.xlu0 %1321
        %1323 = vrot.lane.b32.xlu0 %v1060, 20
        %v1324 = vpop.permute.xlu0 %1323
        %1325 = vrot.lane.b32.xlu0 %v1061, 20
        %v1326 = vpop.permute.xlu0 %1325
        %1327 = vrot.lane.b32.xlu0 %v1062, 20
        %v1328 = vpop.permute.xlu0 %1327
        %1329 = vrot.lane.b32.xlu0 %v1063, 20
        %v1330 = vpop.permute.xlu0 %1329
        %1331 = vrot.lane.b32.xlu0 %v1064, 20
        %v1332 = vpop.permute.xlu0 %1331
        %1333 = vrot.lane.b32.xlu0 %v1302, 20
        %v1334 = vpop.permute.xlu0 %1333
        %vm1351 = vcmask 195744
        %1352 = vst.msk [vmem:[#allocation2] sm:$0xff] %vm1351, %v1304
        %1353 = vst.msk [vmem:[#allocation2 + $0x8] sm:$0xff] %vm1351, %v1306
        %1354 = vst.msk [vmem:[#allocation2 + $0x10] sm:$0xff] %vm1351, %v1308
        %1355 = vst.msk [vmem:[#allocation2 + $0x18] sm:$0xff] %vm1351, %v1310
        %1356 = vst.msk [vmem:[#allocation2 + $0x20] sm:$0xff] %vm1351, %v1312
        %1357 = vst.msk [vmem:[#allocation2 + $0x28] sm:$0xff] %vm1351, %v1314
        %1358 = vst.msk [vmem:[#allocation2 + $0x30] sm:$0xff] %vm1351, %v1316
        %1359 = vst.msk [vmem:[#allocation2 + $0x38] sm:$0xff] %vm1351, %v1318
        %1360 = vst.msk [vmem:[#allocation2 + $0x40] sm:$0xff] %vm1351, %v1320
        %1361 = vst.msk [vmem:[#allocation2 + $0x48] sm:$0xff] %vm1351, %v1322
        %1362 = vst.msk [vmem:[#allocation2 + $0x50] sm:$0xff] %vm1351, %v1324
        %1363 = vst.msk [vmem:[#allocation2 + $0x58] sm:$0xff] %vm1351, %v1326
        %1364 = vst.msk [vmem:[#allocation2 + $0x60] sm:$0xff] %vm1351, %v1328
        %1365 = vst.msk [vmem:[#allocation2 + $0x68] sm:$0xff] %vm1351, %v1330
        %1366 = vst.msk [vmem:[#allocation2 + $0x70] sm:$0xff] %vm1351, %v1332
        %1367 = vst.msk [vmem:[#allocation2 + $0x78] sm:$0xff] %vm1351, %v1334
        %v1370 = vunpack.c.l.b16 %v253
        %v1371 = vunpack.c.l.b16 %v254
        %v1372 = vpack.c.b16 %v1371, %v1370
        %1373 = vrot.lane.b32.xlu0 %v339, 24
        %v1374 = vpop.permute.xlu0 %1373
        %1375 = vrot.lane.b32.xlu0 %v340, 24
        %v1376 = vpop.permute.xlu0 %1375
        %1377 = vrot.lane.b32.xlu0 %v341, 24
        %v1378 = vpop.permute.xlu0 %1377
        %1379 = vrot.lane.b32.xlu0 %v342, 24
        %v1380 = vpop.permute.xlu0 %1379
        %1381 = vrot.lane.b32.xlu0 %v343, 24
        %v1382 = vpop.permute.xlu0 %1381
        %1383 = vrot.lane.b32.xlu0 %v344, 24
        %v1384 = vpop.permute.xlu0 %1383
        %1385 = vrot.lane.b32.xlu0 %v345, 24
        %v1386 = vpop.permute.xlu0 %1385
        %1387 = vrot.lane.b32.xlu0 %v346, 24
        %v1388 = vpop.permute.xlu0 %1387
        %1389 = vrot.lane.b32.xlu0 %v347, 24
        %v1390 = vpop.permute.xlu0 %1389
        %1391 = vrot.lane.b32.xlu0 %v348, 24
        %v1392 = vpop.permute.xlu0 %1391
        %1393 = vrot.lane.b32.xlu0 %v349, 24
        %v1394 = vpop.permute.xlu0 %1393
        %1395 = vrot.lane.b32.xlu0 %v350, 24
        %v1396 = vpop.permute.xlu0 %1395
        %1397 = vrot.lane.b32.xlu0 %v351, 24
        %v1398 = vpop.permute.xlu0 %1397
        %1399 = vrot.lane.b32.xlu0 %v352, 24
        %v1400 = vpop.permute.xlu0 %1399
        %1401 = vrot.lane.b32.xlu0 %v1134, 24
        %v1402 = vpop.permute.xlu0 %1401
        %1403 = vrot.lane.b32.xlu0 %v1372, 24
        %v1404 = vpop.permute.xlu0 %1403
        %vm1421 = vcmask 228544
        %1422 = vst.msk [vmem:[#allocation2] sm:$0xff] %vm1421, %v1374
        %1423 = vst.msk [vmem:[#allocation2 + $0x8] sm:$0xff] %vm1421, %v1376
        %1424 = vst.msk [vmem:[#allocation2 + $0x10] sm:$0xff] %vm1421, %v1378
        %1425 = vst.msk [vmem:[#allocation2 + $0x18] sm:$0xff] %vm1421, %v1380
        %1426 = vst.msk [vmem:[#allocation2 + $0x20] sm:$0xff] %vm1421, %v1382
        %1427 = vst.msk [vmem:[#allocation2 + $0x28] sm:$0xff] %vm1421, %v1384
        %1428 = vst.msk [vmem:[#allocation2 + $0x30] sm:$0xff] %vm1421, %v1386
        %1429 = vst.msk [vmem:[#allocation2 + $0x38] sm:$0xff] %vm1421, %v1388
        %1430 = vst.msk [vmem:[#allocation2 + $0x40] sm:$0xff] %vm1421, %v1390
        %1431 = vst.msk [vmem:[#allocation2 + $0x48] sm:$0xff] %vm1421, %v1392
        %1432 = vst.msk [vmem:[#allocation2 + $0x50] sm:$0xff] %vm1421, %v1394
        %1433 = vst.msk [vmem:[#allocation2 + $0x58] sm:$0xff] %vm1421, %v1396
        %1434 = vst.msk [vmem:[#allocation2 + $0x60] sm:$0xff] %vm1421, %v1398
        %1435 = vst.msk [vmem:[#allocation2 + $0x68] sm:$0xff] %vm1421, %v1400
        %1436 = vst.msk [vmem:[#allocation2 + $0x70] sm:$0xff] %vm1421, %v1402
        %1437 = vst.msk [vmem:[#allocation2 + $0x78] sm:$0xff] %vm1421, %v1404
        %v1439 = vshrl.u32 %v253, 16
        %v1441 = vrot.slane %v1439, 4
        %v1442 = vshll.u32 %v253, 16
        %v1444 = vrot.slane %v1442, 5
        %v1445 = vor.u32 %v1441, %v1444
        %v1446 = vrot.slane %v1445, 4
        %v1448 = vshll.u32 %v254, 16
        %v1450 = vrot.slane %v1448, 5
        %v1451 = vsel %vm388, %v1446, %v1450
        %v1452 = vshrl.u32 %v254, 16
        %v1454 = vrot.slane %v1452, 4
        %v1455 = vor.u32 %v1454, %v1450
        %v1456 = vrot.slane %v1455, 4
        %v1458 = vshll.u32 %v255, 16
        %v1460 = vrot.slane %v1458, 5
        %v1461 = vsel %vm388, %v1456, %v1460
        %v1462 = vunpack.c.l.b16 %v1451
        %v1463 = vunpack.c.l.b16 %v1461
        %v1464 = vpack.c.b16 %v1463, %v1462
        %1465 = vrot.lane.b32.xlu0 %v807, 28
        %v1466 = vpop.permute.xlu0 %1465
        %1467 = vrot.lane.b32.xlu0 %v808, 28
        %v1468 = vpop.permute.xlu0 %1467
        %1469 = vrot.lane.b32.xlu0 %v809, 28
        %v1470 = vpop.permute.xlu0 %1469
        %1471 = vrot.lane.b32.xlu0 %v810, 28
        %v1472 = vpop.permute.xlu0 %1471
        %1473 = vrot.lane.b32.xlu0 %v811, 28
        %v1474 = vpop.permute.xlu0 %1473
        %1475 = vrot.lane.b32.xlu0 %v812, 28
        %v1476 = vpop.permute.xlu0 %1475
        %1477 = vrot.lane.b32.xlu0 %v813, 28
        %v1478 = vpop.permute.xlu0 %1477
        %1479 = vrot.lane.b32.xlu0 %v814, 28
        %v1480 = vpop.permute.xlu0 %1479
        %1481 = vrot.lane.b32.xlu0 %v815, 28
        %v1482 = vpop.permute.xlu0 %1481
        %1483 = vrot.lane.b32.xlu0 %v816, 28
        %v1484 = vpop.permute.xlu0 %1483
        %1485 = vrot.lane.b32.xlu0 %v817, 28
        %v1486 = vpop.permute.xlu0 %1485
        %1487 = vrot.lane.b32.xlu0 %v818, 28
        %v1488 = vpop.permute.xlu0 %1487
        %1489 = vrot.lane.b32.xlu0 %v819, 28
        %v1490 = vpop.permute.xlu0 %1489
        %1491 = vrot.lane.b32.xlu0 %v820, 28
        %v1492 = vpop.permute.xlu0 %1491
        %1493 = vrot.lane.b32.xlu0 %v1226, 28
        %v1494 = vpop.permute.xlu0 %1493
        %1495 = vrot.lane.b32.xlu0 %v1464, 28
        %v1496 = vpop.permute.xlu0 %1495
        %vm1513 = vcmask 261344
        %1514 = vst.msk [vmem:[#allocation2] sm:$0xff] %vm1513, %v1466
        %1515 = vst.msk [vmem:[#allocation2 + $0x8] sm:$0xff] %vm1513, %v1468
        %1516 = vst.msk [vmem:[#allocation2 + $0x10] sm:$0xff] %vm1513, %v1470
        %1517 = vst.msk [vmem:[#allocation2 + $0x18] sm:$0xff] %vm1513, %v1472
        %1518 = vst.msk [vmem:[#allocation2 + $0x20] sm:$0xff] %vm1513, %v1474
        %1519 = vst.msk [vmem:[#allocation2 + $0x28] sm:$0xff] %vm1513, %v1476
        %1520 = vst.msk [vmem:[#allocation2 + $0x30] sm:$0xff] %vm1513, %v1478
        %1521 = vst.msk [vmem:[#allocation2 + $0x38] sm:$0xff] %vm1513, %v1480
        %1522 = vst.msk [vmem:[#allocation2 + $0x40] sm:$0xff] %vm1513, %v1482
        %1523 = vst.msk [vmem:[#allocation2 + $0x48] sm:$0xff] %vm1513, %v1484
        %1524 = vst.msk [vmem:[#allocation2 + $0x50] sm:$0xff] %vm1513, %v1486
        %1525 = vst.msk [vmem:[#allocation2 + $0x58] sm:$0xff] %vm1513, %v1488
        %1526 = vst.msk [vmem:[#allocation2 + $0x60] sm:$0xff] %vm1513, %v1490
        %1527 = vst.msk [vmem:[#allocation2 + $0x68] sm:$0xff] %vm1513, %v1492
        %1528 = vst.msk [vmem:[#allocation2 + $0x70] sm:$0xff] %vm1513, %v1494
        %1529 = vst.msk [vmem:[#allocation2 + $0x78] sm:$0xff] %vm1513, %v1496
        %v1531 = vrot.slane %v253, 5
        %v1532 = vrot.slane %v1531, 4
        %v1533 = vrot.slane %v254, 5
        %v1534 = vsel %vm904, %v1532, %v1533
        %v1535 = vrot.slane %v1533, 4
        %v1536 = vrot.slane %v255, 5
        %v1537 = vsel %vm904, %v1535, %v1536
        %v1538 = vunpack.c.l.b16 %v1534
        %v1539 = vunpack.c.l.b16 %v1537
        %v1540 = vpack.c.b16 %v1539, %v1538
        %1541 = vrot.lane.b32.xlu0 %v1051, 32
        %v1542 = vpop.permute.xlu0 %1541
        %1543 = vrot.lane.b32.xlu0 %v1052, 32
        %v1544 = vpop.permute.xlu0 %1543
        %1545 = vrot.lane.b32.xlu0 %v1053, 32
        %v1546 = vpop.permute.xlu0 %1545
        %1547 = vrot.lane.b32.xlu0 %v1054, 32
        %v1548 = vpop.permute.xlu0 %1547
        %1549 = vrot.lane.b32.xlu0 %v1055, 32
        %v1550 = vpop.permute.xlu0 %1549
        %1551 = vrot.lane.b32.xlu0 %v1056, 32
        %v1552 = vpop.permute.xlu0 %1551
        %1553 = vrot.lane.b32.xlu0 %v1057, 32
        %v1554 = vpop.permute.xlu0 %1553
        %1555 = vrot.lane.b32.xlu0 %v1058, 32
        %v1556 = vpop.permute.xlu0 %1555
        %1557 = vrot.lane.b32.xlu0 %v1059, 32
        %v1558 = vpop.permute.xlu0 %1557
        %1559 = vrot.lane.b32.xlu0 %v1060, 32
        %v1560 = vpop.permute.xlu0 %1559
        %1561 = vrot.lane.b32.xlu0 %v1061, 32
        %v1562 = vpop.permute.xlu0 %1561
        %1563 = vrot.lane.b32.xlu0 %v1062, 32
        %v1564 = vpop.permute.xlu0 %1563
        %1565 = vrot.lane.b32.xlu0 %v1063, 32
        %v1566 = vpop.permute.xlu0 %1565
        %1567 = vrot.lane.b32.xlu0 %v1064, 32
        %v1568 = vpop.permute.xlu0 %1567
        %1569 = vrot.lane.b32.xlu0 %v1302, 32
        %v1570 = vpop.permute.xlu0 %1569
        %1571 = vrot.lane.b32.xlu0 %v1540, 32
        %v1572 = vpop.permute.xlu0 %1571
        %vm1589 = vcmask 294144
        %1590 = vst.msk [vmem:[#allocation2] sm:$0xff] %vm1589, %v1542
        %1591 = vst.msk [vmem:[#allocation2 + $0x8] sm:$0xff] %vm1589, %v1544
        %1592 = vst.msk [vmem:[#allocation2 + $0x10] sm:$0xff] %vm1589, %v1546
        %1593 = vst.msk [vmem:[#allocation2 + $0x18] sm:$0xff] %vm1589, %v1548
        %1594 = vst.msk [vmem:[#allocation2 + $0x20] sm:$0xff] %vm1589, %v1550
        %1595 = vst.msk [vmem:[#allocation2 + $0x28] sm:$0xff] %vm1589, %v1552
        %1596 = vst.msk [vmem:[#allocation2 + $0x30] sm:$0xff] %vm1589, %v1554
        %1597 = vst.msk [vmem:[#allocation2 + $0x38] sm:$0xff] %vm1589, %v1556
        %1598 = vst.msk [vmem:[#allocation2 + $0x40] sm:$0xff] %vm1589, %v1558
        %1599 = vst.msk [vmem:[#allocation2 + $0x48] sm:$0xff] %vm1589, %v1560
        %1600 = vst.msk [vmem:[#allocation2 + $0x50] sm:$0xff] %vm1589, %v1562
        %1601 = vst.msk [vmem:[#allocation2 + $0x58] sm:$0xff] %vm1589, %v1564
        %1602 = vst.msk [vmem:[#allocation2 + $0x60] sm:$0xff] %vm1589, %v1566
        %1603 = vst.msk [vmem:[#allocation2 + $0x68] sm:$0xff] %vm1589, %v1568
        %1604 = vst.msk [vmem:[#allocation2 + $0x70] sm:$0xff] %vm1589, %v1570
        %1605 = vst.msk [vmem:[#allocation2 + $0x78] sm:$0xff] %vm1589, %v1572
        %v1606 = vld [vmem:[#allocation2] sm:$0xff]
        %v1607 = vld [vmem:[#allocation2 + $0x8] sm:$0xff]
        %v1608 = vld [vmem:[#allocation2 + $0x10] sm:$0xff]
        %v1609 = vld [vmem:[#allocation2 + $0x18] sm:$0xff]
        %v1610 = vld [vmem:[#allocation2 + $0x20] sm:$0xff]
        %v1611 = vld [vmem:[#allocation2 + $0x28] sm:$0xff]
        %v1612 = vld [vmem:[#allocation2 + $0x30] sm:$0xff]
        %v1613 = vld [vmem:[#allocation2 + $0x38] sm:$0xff]
        %v1614 = vld [vmem:[#allocation2 + $0x40] sm:$0xff]
        %v1615 = vld [vmem:[#allocation2 + $0x48] sm:$0xff]
        %v1616 = vld [vmem:[#allocation2 + $0x50] sm:$0xff]
        %v1617 = vld [vmem:[#allocation2 + $0x58] sm:$0xff]
        %v1618 = vld [vmem:[#allocation2 + $0x60] sm:$0xff]
        %v1619 = vld [vmem:[#allocation2 + $0x68] sm:$0xff]
        %v1620 = vld [vmem:[#allocation2 + $0x70] sm:$0xff]
        %v1621 = vld [vmem:[#allocation2 + $0x78] sm:$0xff]
        %v1622 = vld [vmem:[%s1] sm:$0xf]
        %v1623 = vld [vmem:[%s1 + $0x4] sm:$0xf]
        %v1624 = vld [vmem:[%s1 + $0x8] sm:$0xf]
        %v1625 = vld [vmem:[%s1 + $0xc] sm:$0xf]
        %v1626 = vld [vmem:[%s1 + $0x10] sm:$0xf]
        %v1627 = vld [vmem:[%s1 + $0x14] sm:$0xf]
        %v1628 = vld [vmem:[%s1 + $0x18] sm:$0xf]
        %v1629 = vld [vmem:[%s1 + $0x1c] sm:$0xf]
        %v1630 = vld [vmem:[%s1 + $0x20] sm:$0xf]
        %v1631 = vld [vmem:[%s1 + $0x24] sm:$0xf]
        %v1632 = vld [vmem:[%s1 + $0x28] sm:$0xf]
        %v1633 = vld [vmem:[%s1 + $0x2c] sm:$0xf]
        %v1634 = vld [vmem:[%s1 + $0x30] sm:$0xf]
        %v1635 = vld [vmem:[%s1 + $0x34] sm:$0xf]
        %v1636 = vld [vmem:[%s1 + $0x38] sm:$0xf]
        %v1637 = vld [vmem:[%s1 + $0x3c] sm:$0xf]
        %v1654 = vunpack.c.l.b16 %v1622
        %v1655 = vunpack.c.l.b16 %v1623
        %v1656 = vunpack.c.l.b16 %v1624
        %v1657 = vunpack.c.l.b16 %v1625
        %v1658 = vunpack.c.l.b16 %v1626
        %v1659 = vunpack.c.l.b16 %v1627
        %v1660 = vunpack.c.l.b16 %v1628
        %v1661 = vunpack.c.l.b16 %v1629
        %v1662 = vunpack.c.l.b16 %v1630
        %v1663 = vunpack.c.l.b16 %v1631
        %v1664 = vunpack.c.l.b16 %v1632
        %v1665 = vunpack.c.l.b16 %v1633
        %v1666 = vunpack.c.l.b16 %v1634
        %v1667 = vunpack.c.l.b16 %v1635
        %v1668 = vunpack.c.l.b16 %v1636
        %v1669 = vunpack.c.l.b16 %v1637
        %v1670 = vpack.c.b16 %v1655, %v1654
        %v1671 = vpack.c.b16 %v1657, %v1656
        %v1672 = vpack.c.b16 %v1659, %v1658
        %v1673 = vpack.c.b16 %v1661, %v1660
        %v1674 = vpack.c.b16 %v1663, %v1662
        %v1675 = vpack.c.b16 %v1665, %v1664
        %v1676 = vpack.c.b16 %v1667, %v1666
        %v1677 = vpack.c.b16 %v1669, %v1668
        %1686 = vmatprep.subr.bf16.mxu0 0
        %1687 = vmatpush1.bf16.msra.mxu0 %v1670
        %1688 = vmatprep.subr.bf16.mxu0 0
        %1689 = vmatpush1.bf16.msra.mxu0 %v1671
        %1690 = vmatprep.subr.bf16.mxu0 0
        %1691 = vmatpush1.bf16.msra.mxu0 %v1672
        %1692 = vmatprep.subr.bf16.mxu0 0
        %1693 = vmatpush1.bf16.msra.mxu0 %v1673
        %1694 = vmatprep.subr.bf16.mxu0 0
        %1695 = vmatpush1.bf16.msra.mxu0 %v1674
        %1696 = vmatprep.subr.bf16.mxu0 0
        %1697 = vmatpush1.bf16.msra.mxu0 %v1675
        %1698 = vmatprep.subr.bf16.mxu0 0
        %1699 = vmatpush1.bf16.msra.mxu0 %v1676
        %1700 = vmatprep.subr.bf16.mxu0 0
        %1701 = vmatpush1.bf16.msra.mxu0 %v1677
        %1702 = vmatprep.subr.bf16.mxu0 0
        %1703 = vmatpush1.bf16.msra.mxu0 0
        %1704 = vmatprep.subr.bf16.mxu0 0
        %1705 = vmatpush1.bf16.msra.mxu0 0
        %1706 = vmatprep.subr.bf16.mxu0 0
        %1707 = vmatpush1.bf16.msra.mxu0 0
        %1708 = vmatprep.subr.bf16.mxu0 0
        %1709 = vmatpush1.bf16.msra.mxu0 0
        %1710 = vmatprep.subr.bf16.mxu0 0
        %1711 = vmatpush1.bf16.msra.mxu0 0
        %1712 = vmatprep.subr.bf16.mxu0 0
        %1713 = vmatpush1.bf16.msra.mxu0 0
        %1714 = vmatprep.subr.bf16.mxu0 0
        %1715 = vmatpush1.bf16.msra.mxu0 0
        %1716 = vmatprep.subr.bf16.mxu0 0
        %1717 = vmatpush1.bf16.msra.mxu0 0
        %1718 = vmatprep.mubr.bf16.mxu0 0
        %1719 = vmatmul.mubr.bf16.gmra.mrb[0].mxu0 %v1606
        %v1720 = vpop.f32.mrb[0].mxu0
        %v1721 = vadd.f32 0.0, %v1720
        %v1722 = vpop.f32.mrb[0].mxu0
        %v1723 = vpop.f32.mrb[0].mxu0
        %v1724 = vadd.f32 0.0, %v1723
        %v1725 = vpop.f32.mrb[0].mxu0
        %1726 = vmatprep.mubr.bf16.mxu0 0
        %1727 = vmatmul.mubr.bf16.gmra.mrb[0].mxu0 %v1607
        %v1728 = vpop.f32.mrb[0].mxu0
        %v1729 = vadd.f32 0.0, %v1728
        %v1730 = vpop.f32.mrb[0].mxu0
        %v1731 = vpop.f32.mrb[0].mxu0
        %v1732 = vadd.f32 0.0, %v1731
        %v1733 = vpop.f32.mrb[0].mxu0
        %1734 = vmatprep.mubr.bf16.mxu0 0
        %1735 = vmatmul.mubr.bf16.gmra.mrb[0].mxu0 %v1608
        %v1736 = vpop.f32.mrb[0].mxu0
        %v1737 = vadd.f32 0.0, %v1736
        %v1738 = vpop.f32.mrb[0].mxu0
        %v1739 = vpop.f32.mrb[0].mxu0
        %v1740 = vadd.f32 0.0, %v1739
        %v1741 = vpop.f32.mrb[0].mxu0
        %1742 = vmatprep.mubr.bf16.mxu0 0
        %1743 = vmatmul.mubr.bf16.gmra.mrb[0].mxu0 %v1609
        %v1744 = vpop.f32.mrb[0].mxu0
        %v1745 = vadd.f32 0.0, %v1744
        %v1746 = vpop.f32.mrb[0].mxu0
        %v1747 = vpop.f32.mrb[0].mxu0
        %v1748 = vadd.f32 0.0, %v1747
        %v1749 = vpop.f32.mrb[0].mxu0
        %1750 = vmatprep.mubr.bf16.mxu0 0
        %1751 = vmatmul.mubr.bf16.gmra.mrb[0].mxu0 %v1610
        %v1752 = vpop.f32.mrb[0].mxu0
        %v1753 = vadd.f32 0.0, %v1752
        %v1754 = vpop.f32.mrb[0].mxu0
        %v1755 = vpop.f32.mrb[0].mxu0
        %v1756 = vadd.f32 0.0, %v1755
        %v1757 = vpop.f32.mrb[0].mxu0
        %1758 = vmatprep.mubr.bf16.mxu0 0
        %1759 = vmatmul.mubr.bf16.gmra.mrb[0].mxu0 %v1611
        %v1760 = vpop.f32.mrb[0].mxu0
        %v1761 = vadd.f32 0.0, %v1760
        %v1762 = vpop.f32.mrb[0].mxu0
        %v1763 = vpop.f32.mrb[0].mxu0
        %v1764 = vadd.f32 0.0, %v1763
        %v1765 = vpop.f32.mrb[0].mxu0
        %1766 = vmatprep.mubr.bf16.mxu0 0
        %1767 = vmatmul.mubr.bf16.gmra.mrb[0].mxu0 %v1612
        %v1768 = vpop.f32.mrb[0].mxu0
        %v1769 = vadd.f32 0.0, %v1768
        %v1770 = vpop.f32.mrb[0].mxu0
        %v1771 = vpop.f32.mrb[0].mxu0
        %v1772 = vadd.f32 0.0, %v1771
        %v1773 = vpop.f32.mrb[0].mxu0
        %1774 = vmatprep.mubr.bf16.mxu0 0
        %1775 = vmatmul.mubr.bf16.gmra.mrb[0].mxu0 %v1613
        %v1776 = vpop.f32.mrb[0].mxu0
        %v1777 = vadd.f32 0.0, %v1776
        %v1778 = vpop.f32.mrb[0].mxu0
        %v1779 = vpop.f32.mrb[0].mxu0
        %v1780 = vadd.f32 0.0, %v1779
        %v1781 = vpop.f32.mrb[0].mxu0
        %1782 = vmatprep.mubr.bf16.mxu0 0
        %1783 = vmatmul.mubr.bf16.gmra.mrb[0].mxu0 %v1614
        %v1784 = vpop.f32.mrb[0].mxu0
        %v1785 = vadd.f32 0.0, %v1784
        %v1786 = vpop.f32.mrb[0].mxu0
        %v1787 = vpop.f32.mrb[0].mxu0
        %v1788 = vadd.f32 0.0, %v1787
        %v1789 = vpop.f32.mrb[0].mxu0
        %1790 = vmatprep.mubr.bf16.mxu0 0
        %1791 = vmatmul.mubr.bf16.gmra.mrb[0].mxu0 %v1615
        %v1792 = vpop.f32.mrb[0].mxu0
        %v1793 = vadd.f32 0.0, %v1792
        %v1794 = vpop.f32.mrb[0].mxu0
        %v1795 = vpop.f32.mrb[0].mxu0
        %v1796 = vadd.f32 0.0, %v1795
        %v1797 = vpop.f32.mrb[0].mxu0
        %1798 = vmatprep.mubr.bf16.mxu0 0
        %1799 = vmatmul.mubr.bf16.gmra.mrb[0].mxu0 %v1616
        %v1800 = vpop.f32.mrb[0].mxu0
        %v1801 = vadd.f32 0.0, %v1800
        %v1802 = vpop.f32.mrb[0].mxu0
        %v1803 = vpop.f32.mrb[0].mxu0
        %v1804 = vadd.f32 0.0, %v1803
        %v1805 = vpop.f32.mrb[0].mxu0
        %1806 = vmatprep.mubr.bf16.mxu0 0
        %1807 = vmatmul.mubr.bf16.gmra.mrb[0].mxu0 %v1617
        %v1808 = vpop.f32.mrb[0].mxu0
        %v1809 = vadd.f32 0.0, %v1808
        %v1810 = vpop.f32.mrb[0].mxu0
        %v1811 = vpop.f32.mrb[0].mxu0
        %v1812 = vadd.f32 0.0, %v1811
        %v1813 = vpop.f32.mrb[0].mxu0
        %1814 = vmatprep.mubr.bf16.mxu0 0
        %1815 = vmatmul.mubr.bf16.gmra.mrb[0].mxu0 %v1618
        %v1816 = vpop.f32.mrb[0].mxu0
        %v1817 = vadd.f32 0.0, %v1816
        %v1818 = vpop.f32.mrb[0].mxu0
        %v1819 = vpop.f32.mrb[0].mxu0
        %v1820 = vadd.f32 0.0, %v1819
        %v1821 = vpop.f32.mrb[0].mxu0
        %1822 = vmatprep.mubr.bf16.mxu0 0
        %1823 = vmatmul.mubr.bf16.gmra.mrb[0].mxu0 %v1619
        %v1824 = vpop.f32.mrb[0].mxu0
        %v1825 = vadd.f32 0.0, %v1824
        %v1826 = vpop.f32.mrb[0].mxu0
        %v1827 = vpop.f32.mrb[0].mxu0
        %v1828 = vadd.f32 0.0, %v1827
        %v1829 = vpop.f32.mrb[0].mxu0
        %1830 = vmatprep.mubr.bf16.mxu0 0
        %1831 = vmatmul.mubr.bf16.gmra.mrb[0].mxu0 %v1620
        %v1832 = vpop.f32.mrb[0].mxu0
        %v1833 = vadd.f32 0.0, %v1832
        %v1834 = vpop.f32.mrb[0].mxu0
        %v1835 = vpop.f32.mrb[0].mxu0
        %v1836 = vadd.f32 0.0, %v1835
        %v1837 = vpop.f32.mrb[0].mxu0
        %1838 = vmatprep.mubr.bf16.mxu0 0
        %1839 = vmatmul.mubr.bf16.gmra.mrb[0].mxu0 %v1621
        %v1840 = vpop.f32.mrb[0].mxu0
        %v1841 = vadd.f32 0.0, %v1840
        %v1842 = vpop.f32.mrb[0].mxu0
        %v1843 = vpop.f32.mrb[0].mxu0
        %v1844 = vadd.f32 0.0, %v1843
        %v1845 = vpop.f32.mrb[0].mxu0
        %1846 = vdwg.mxu0
        %v1847 = vpack.c.bf16 %v1724, %v1721
        %v1848 = vpack.c.bf16 %v1732, %v1729
        %v1849 = vpack.c.bf16 %v1740, %v1737
        %v1850 = vpack.c.bf16 %v1748, %v1745
        %v1851 = vpack.c.bf16 %v1756, %v1753
        %v1852 = vpack.c.bf16 %v1764, %v1761
        %v1853 = vpack.c.bf16 %v1772, %v1769
        %v1854 = vpack.c.bf16 %v1780, %v1777
        %v1855 = vpack.c.bf16 %v1788, %v1785
        %v1856 = vpack.c.bf16 %v1796, %v1793
        %v1857 = vpack.c.bf16 %v1804, %v1801
        %v1858 = vpack.c.bf16 %v1812, %v1809
        %v1859 = vpack.c.bf16 %v1820, %v1817
        %v1860 = vpack.c.bf16 %v1828, %v1825
        %v1861 = vpack.c.bf16 %v1836, %v1833
        %v1862 = vpack.c.bf16 %v1844, %v1841
        %v1879 = vunpack.c.l.b16 %v1847
        %v1880 = vunpack.c.h.b16 %v1847
        %v1881 = vunpack.c.l.b16 %v1848
        %v1882 = vunpack.c.h.b16 %v1848
        %v1883 = vunpack.c.l.b16 %v1849
        %v1884 = vunpack.c.h.b16 %v1849
        %v1885 = vunpack.c.l.b16 %v1850
        %v1886 = vunpack.c.h.b16 %v1850
        %v1887 = vunpack.c.l.b16 %v1851
        %v1888 = vunpack.c.h.b16 %v1851
        %v1889 = vunpack.c.l.b16 %v1852
        %v1890 = vunpack.c.h.b16 %v1852
        %v1891 = vunpack.c.l.b16 %v1853
        %v1892 = vunpack.c.h.b16 %v1853
        %v1893 = vunpack.c.l.b16 %v1854
        %v1894 = vunpack.c.h.b16 %v1854
        %v1895 = vunpack.c.l.b16 %v1855
        %v1896 = vunpack.c.h.b16 %v1855
        %v1897 = vunpack.c.l.b16 %v1856
        %v1898 = vunpack.c.h.b16 %v1856
        %v1899 = vunpack.c.l.b16 %v1857
        %v1900 = vunpack.c.h.b16 %v1857
        %v1901 = vunpack.c.l.b16 %v1858
        %v1902 = vunpack.c.h.b16 %v1858
        %v1903 = vunpack.c.l.b16 %v1859
        %v1904 = vunpack.c.h.b16 %v1859
        %v1905 = vunpack.c.l.b16 %v1860
        %v1906 = vunpack.c.h.b16 %v1860
        %v1907 = vunpack.c.l.b16 %v1861
        %v1908 = vunpack.c.h.b16 %v1861
        %v1909 = vunpack.c.l.b16 %v1862
        %v1910 = vunpack.c.h.b16 %v1862
        %v1911 = vpack.c.b16 %v1879, %v1879
        %v1912 = vpack.c.b16 %v1880, %v1880
        %v1913 = vpack.c.b16 %v1881, %v1881
        %v1914 = vpack.c.b16 %v1882, %v1882
        %v1915 = vpack.c.b16 %v1883, %v1883
        %v1916 = vpack.c.b16 %v1884, %v1884
        %v1917 = vpack.c.b16 %v1885, %v1885
        %v1918 = vpack.c.b16 %v1886, %v1886
        %v1919 = vpack.c.b16 %v1887, %v1887
        %v1920 = vpack.c.b16 %v1888, %v1888
        %v1921 = vpack.c.b16 %v1889, %v1889
        %v1922 = vpack.c.b16 %v1890, %v1890
        %v1923 = vpack.c.b16 %v1891, %v1891
        %v1924 = vpack.c.b16 %v1892, %v1892
        %v1925 = vpack.c.b16 %v1893, %v1893
        %v1926 = vpack.c.b16 %v1894, %v1894
        %v1927 = vpack.c.b16 %v1895, %v1895
        %v1928 = vpack.c.b16 %v1896, %v1896
        %v1929 = vpack.c.b16 %v1897, %v1897
        %v1930 = vpack.c.b16 %v1898, %v1898
        %v1931 = vpack.c.b16 %v1899, %v1899
        %v1932 = vpack.c.b16 %v1900, %v1900
        %v1933 = vpack.c.b16 %v1901, %v1901
        %v1934 = vpack.c.b16 %v1902, %v1902
        %v1935 = vpack.c.b16 %v1903, %v1903
        %v1936 = vpack.c.b16 %v1904, %v1904
        %v1937 = vpack.c.b16 %v1905, %v1905
        %v1938 = vpack.c.b16 %v1906, %v1906
        %v1939 = vpack.c.b16 %v1907, %v1907
        %v1940 = vpack.c.b16 %v1908, %v1908
        %v1941 = vpack.c.b16 %v1909, %v1909
        %v1942 = vpack.c.b16 %v1910, %v1910
        %1975 = vst [vmem:[%s183] sm:$0xf] %v1911
        %1976 = vst [vmem:[%s183 + $0x4] sm:$0xf] %v1912
        %1977 = vst [vmem:[%s183 + $0x8] sm:$0xf] %v1913
        %1978 = vst [vmem:[%s183 + $0xc] sm:$0xf] %v1914
        %1979 = vst [vmem:[%s183 + $0x10] sm:$0xf] %v1915
        %1980 = vst [vmem:[%s183 + $0x14] sm:$0xf] %v1916
        %1981 = vst [vmem:[%s183 + $0x18] sm:$0xf] %v1917
        %1982 = vst [vmem:[%s183 + $0x1c] sm:$0xf] %v1918
        %1983 = vst [vmem:[%s183 + $0x20] sm:$0xf] %v1919
        %1984 = vst [vmem:[%s183 + $0x24] sm:$0xf] %v1920
        %1985 = vst [vmem:[%s183 + $0x28] sm:$0xf] %v1921
        %1986 = vst [vmem:[%s183 + $0x2c] sm:$0xf] %v1922
        %1987 = vst [vmem:[%s183 + $0x30] sm:$0xf] %v1923
        %1988 = vst [vmem:[%s183 + $0x34] sm:$0xf] %v1924
        %1989 = vst [vmem:[%s183 + $0x38] sm:$0xf] %v1925
        %1990 = vst [vmem:[%s183 + $0x3c] sm:$0xf] %v1926
        %1991 = vst [vmem:[%s183 + $0x40] sm:$0xf] %v1927
        %1992 = vst [vmem:[%s183 + $0x44] sm:$0xf] %v1928
        %1993 = vst [vmem:[%s183 + $0x48] sm:$0xf] %v1929
        %1994 = vst [vmem:[%s183 + $0x4c] sm:$0xf] %v1930
        %1995 = vst [vmem:[%s183 + $0x50] sm:$0xf] %v1931
        %1996 = vst [vmem:[%s183 + $0x54] sm:$0xf] %v1932
        %1997 = vst [vmem:[%s183 + $0x58] sm:$0xf] %v1933
        %1998 = vst [vmem:[%s183 + $0x5c] sm:$0xf] %v1934
        %1999 = vst [vmem:[%s183 + $0x60] sm:$0xf] %v1935
        %2000 = vst [vmem:[%s183 + $0x64] sm:$0xf] %v1936
        %2001 = vst [vmem:[%s183 + $0x68] sm:$0xf] %v1937
        %2002 = vst [vmem:[%s183 + $0x6c] sm:$0xf] %v1938
        %2003 = vst [vmem:[%s183 + $0x70] sm:$0xf] %v1939
        %2004 = vst [vmem:[%s183 + $0x74] sm:$0xf] %v1940
        %2005 = vst [vmem:[%s183 + $0x78] sm:$0xf] %v1941
        %2006 = vst [vmem:[%s183 + $0x7c] sm:$0xf] %v1942
        %v2007 = vadd.f32 %v1721, %v1724
        %v2008 = vadd.f32 %v2007, %v1729
        %v2009 = vadd.f32 %v2008, %v1732
        %v2010 = vadd.f32 %v2009, %v1737
        %v2011 = vadd.f32 %v2010, %v1740
        %v2012 = vadd.f32 %v2011, %v1745
        %v2013 = vadd.f32 %v2012, %v1748
        %v2014 = vadd.f32 %v2013, %v1753
        %v2015 = vadd.f32 %v2014, %v1756
        %v2016 = vadd.f32 %v2015, %v1761
        %v2017 = vadd.f32 %v2016, %v1764
        %v2018 = vadd.f32 %v2017, %v1769
        %v2019 = vadd.f32 %v2018, %v1772
        %v2020 = vadd.f32 %v2019, %v1777
        %v2021 = vadd.f32 %v2020, %v1780
        %v2022 = vadd.f32 %v2021, %v1785
        %v2023 = vadd.f32 %v2022, %v1788
        %v2024 = vadd.f32 %v2023, %v1793
        %v2025 = vadd.f32 %v2024, %v1796
        %v2026 = vadd.f32 %v2025, %v1801
        %v2027 = vadd.f32 %v2026, %v1804
        %v2028 = vadd.f32 %v2027, %v1809
        %v2029 = vadd.f32 %v2028, %v1812
        %v2030 = vadd.f32 %v2029, %v1817
        %v2031 = vadd.f32 %v2030, %v1820
        %v2032 = vadd.f32 %v2031, %v1825
        %v2033 = vadd.f32 %v2032, %v1828
        %v2034 = vadd.f32 %v2033, %v1833
        %v2035 = vadd.f32 %v2034, %v1836
        %v2036 = vadd.f32 %v2035, %v1841
        %v2037 = vadd.f32 %v2036, %v1844
        %v2038 = vrot.slane %v2037, 4
        %v2039 = vadd.f32 %v2037, %v2038
        %v2040 = vrot.slane %v2039, 2
        %v2041 = vadd.f32 %v2039, %v2040
        %v2042 = vrot.slane %v2041, 1
        %v2043 = vadd.f32 %v2041, %v2042
        %2044 = vst [vmem:[%s190] sm:$0x1] %v2043
        %v2045 = vmul.f32 %v1721, %v1721
        %v2046 = vmul.f32 %v1724, %v1724
        %v2047 = vmul.f32 %v1729, %v1729
        %v2048 = vmul.f32 %v1732, %v1732
        %v2049 = vmul.f32 %v1737, %v1737
        %v2050 = vmul.f32 %v1740, %v1740
        %v2051 = vmul.f32 %v1745, %v1745
        %v2052 = vmul.f32 %v1748, %v1748
        %v2053 = vmul.f32 %v1753, %v1753
        %v2054 = vmul.f32 %v1756, %v1756
        %v2055 = vmul.f32 %v1761, %v1761
        %v2056 = vmul.f32 %v1764, %v1764
        %v2057 = vmul.f32 %v1769, %v1769
        %v2058 = vmul.f32 %v1772, %v1772
        %v2059 = vmul.f32 %v1777, %v1777
        %v2060 = vmul.f32 %v1780, %v1780
        %v2061 = vmul.f32 %v1785, %v1785
        %v2062 = vmul.f32 %v1788, %v1788
        %v2063 = vmul.f32 %v1793, %v1793
        %v2064 = vmul.f32 %v1796, %v1796
        %v2065 = vmul.f32 %v1801, %v1801
        %v2066 = vmul.f32 %v1804, %v1804
        %v2067 = vmul.f32 %v1809, %v1809
        %v2068 = vmul.f32 %v1812, %v1812
        %v2069 = vmul.f32 %v1817, %v1817
        %v2070 = vmul.f32 %v1820, %v1820
        %v2071 = vmul.f32 %v1825, %v1825
        %v2072 = vmul.f32 %v1828, %v1828
        %v2073 = vmul.f32 %v1833, %v1833
        %v2074 = vmul.f32 %v1836, %v1836
        %v2075 = vmul.f32 %v1841, %v1841
        %v2076 = vmul.f32 %v1844, %v1844
        %v2077 = vadd.f32 %v2045, %v2046
        %v2078 = vadd.f32 %v2077, %v2047
        %v2079 = vadd.f32 %v2078, %v2048
        %v2080 = vadd.f32 %v2079, %v2049
        %v2081 = vadd.f32 %v2080, %v2050
        %v2082 = vadd.f32 %v2081, %v2051
        %v2083 = vadd.f32 %v2082, %v2052
        %v2084 = vadd.f32 %v2083, %v2053
        %v2085 = vadd.f32 %v2084, %v2054
        %v2086 = vadd.f32 %v2085, %v2055
        %v2087 = vadd.f32 %v2086, %v2056
        %v2088 = vadd.f32 %v2087, %v2057
        %v2089 = vadd.f32 %v2088, %v2058
        %v2090 = vadd.f32 %v2089, %v2059
        %v2091 = vadd.f32 %v2090, %v2060
        %v2092 = vadd.f32 %v2091, %v2061
        %v2093 = vadd.f32 %v2092, %v2062
        %v2094 = vadd.f32 %v2093, %v2063
        %v2095 = vadd.f32 %v2094, %v2064
        %v2096 = vadd.f32 %v2095, %v2065
        %v2097 = vadd.f32 %v2096, %v2066
        %v2098 = vadd.f32 %v2097, %v2067
        %v2099 = vadd.f32 %v2098, %v2068
        %v2100 = vadd.f32 %v2099, %v2069
        %v2101 = vadd.f32 %v2100, %v2070
        %v2102 = vadd.f32 %v2101, %v2071
        %v2103 = vadd.f32 %v2102, %v2072
        %v2104 = vadd.f32 %v2103, %v2073
        %v2105 = vadd.f32 %v2104, %v2074
        %v2106 = vadd.f32 %v2105, %v2075
        %v2107 = vadd.f32 %v2106, %v2076
        %v2108 = vrot.slane %v2107, 4
        %v2109 = vadd.f32 %v2107, %v2108
        %v2110 = vrot.slane %v2109, 2
        %v2111 = vadd.f32 %v2109, %v2110
        %v2112 = vrot.slane %v2111, 1
        %v2113 = vadd.f32 %v2111, %v2112
        %2114 = vst [vmem:[%s190 + $0x1] sm:$0x1] %v2113
        %s2115 = sand.u32 %s90, 1
        %s2116 = scalar_lea.sflag [#allocation4], %s2115
        %s2117 = sand.u32 %s90, 1
        %s2118 = smul.addr %s2117, 128
        %s2119 = scalar_lea.vmem [#allocation3], %s2118
        %s2120 = sand.u32 %s118, 1
        %s2121 = scalar_lea.sflag [#allocation6], %s2120
        %s2122 = sand.u32 %s118, 1
        %s2123 = smul.addr %s2122, 2
        %s2124 = scalar_lea.vmem [#allocation5], %s2123
        // Predicated region
        $region29: #{tpu_custom_call.1} parent=27 // pred_check
          %p2125 = pneg %p100
        $region30: #{tpu_custom_call.1} parent=27 // pred_check_branch
          %2127 = sbr.rel (%p2125) target = $region32
        $region31: #{tpu_custom_call.1} parent=27 // pred_region
          %s2128 = smul.u32 32, %s26
          %s2130 = ssub.s32 2048, 2048
          %2131 = vsyncadd %s2116, %s2130
          %s2132 = smul.addr %s25, 32
          %s2133 = sadd.s32 %s2128, %s2132
          %s2134 = smul.addr %s2133, 64
          %s2135 = scalar_lea.hbm %s2, %s2134
          %s2136 = sshll.u32 %s2119, 4
          %s2137 = int_to_ptr.vmem [resolvable:$true] %s2136
          %2142 = dma.vmem_to_hbm [thread:$0]  %s2137, 2048, %s2135, %s2116, 64, 64, 4
        $region32: #{tpu_custom_call.1} parent=27 // pred_fallthru
          _
        // Predicated region
        $region33: #{tpu_custom_call.1} parent=27 // pred_check
          %p2143 = pneg %p128
        $region34: #{tpu_custom_call.1} parent=27 // pred_check_branch
          %2145 = sbr.rel (%p2143) target = $region36
        $region35: #{tpu_custom_call.1} parent=27 // pred_region
          %s2147 = ssub.s32 32, 32
          %2148 = vsyncadd %s2121, %s2147
          %s2149 = sadd.s32 %s26, %s25
          %s2150 = smul.addr %s2149, 32
          %s2151 = scalar_lea.hbm %s3, %s2150
          %s2153 = sshll.u32 %s2124, 4
          %s2154 = int_to_ptr.vmem [resolvable:$true] %s2153
          %2156 = dma.vmem_to_hbm [thread:$0]  %s2154, 32, %s2151, %s2121
        $region36: #{tpu_custom_call.1} parent=27 // pred_fallthru
          _
      $region28: #{tpu_custom_call.1} parent=5 // pred_fallthru
        _
      %p2157 = scmp.le.s32.totalorder 2, %s16
      // Predicated region
      $region37: #{tpu_custom_call.1} parent=5 // pred_check
        %p2158 = pneg %p2157
      $region38: #{tpu_custom_call.1} parent=5 // pred_check_branch
        %2160 = sbr.rel (%p2158) target = $region40
      $region39: #{tpu_custom_call.1} parent=5 // pred_region
        %s2161 = ssub.s32 %s16, 2
        // Predicated region
        $region41: #{tpu_custom_call.1} parent=39 // pred_check
          %p2162 = pneg %p106
        $region42: #{tpu_custom_call.1} parent=39 // pred_check_branch
          %2164 = sbr.rel (%p2162) target = $region44
        $region43: #{tpu_custom_call.1} parent=39 // pred_region
          %s2165 = sand.u32 %s91, 1
          %s2166 = scalar_lea.sflag [#allocation4], %s2165
          %s2167 = sand.u32 %s91, 1
          %s2168 = smul.addr %s2167, 128
          %s2169 = scalar_lea.vmem [#allocation3], %s2168
          %2170 = dma.done %s2166, 2048
        $region44: #{tpu_custom_call.1} parent=39 // pred_fallthru
          _
        // Predicated region
        $region45: #{tpu_custom_call.1} parent=39 // pred_check
          %p2171 = pneg %p134
        $region46: #{tpu_custom_call.1} parent=39 // pred_check_branch
          %2173 = sbr.rel (%p2171) target = $region48
        $region47: #{tpu_custom_call.1} parent=39 // pred_region
          %s2174 = sand.u32 %s119, 1
          %s2175 = scalar_lea.sflag [#allocation6], %s2174
          %s2176 = sand.u32 %s119, 1
          %s2177 = smul.addr %s2176, 2
          %s2178 = scalar_lea.vmem [#allocation5], %s2177
          %2179 = dma.done %s2175, 32
        $region48: #{tpu_custom_call.1} parent=39 // pred_fallthru
          _
      $region40: #{tpu_custom_call.1} parent=5 // pred_fallthru
        _
    $region6: #{tpu_custom_call.1} parent=1 // loop_footer
      %s20 = sadd.s32 1, %s16
    $region7: #{tpu_custom_call.1} parent=1 // loop_footer_branch
      %15 = sbr.rel target = $region3
    $region8: #{tpu_custom_call.1} parent=1 // loop_exit
      _
    %2180 = vsyncpa [#allocation4], 1
    %s2181 = scalar_lea.sflag [#allocation4], 1
    %2182 = vsyncpa %s2181, 1
    %2183 = vsyncpa [#allocation6], 1
    %s2184 = scalar_lea.sflag [#allocation6], 1
    %2185 = vsyncpa %s2184, 1

</llo_original>
